<compile_context>
chip_gen: v7x
topology: tpu7x:2x2x1
jax: 0.10.0
libtpu: 0.0.40
codegen_flags: <defaults>
</compile_context>

<pallas_src>
import functools

import jax
import jax.numpy as jnp
from jax.experimental import pallas as pl
from jax.experimental.pallas import tpu as pltpu


# ----------------------------------------------------------------------------
# Pallas kernel: one time-chunk grid step of a fused bidirectional LSTM layer.
#   xgf_ref : (TT, B, 4H)  precomputed x @ W_ih_f^T + b_f for forward chunk c
#   xgb_ref : (TT, B, 4H)  precomputed x @ W_ih_b^T + b_b for chunk nc-1-c
#   whh_ref : (2, H, 4H)   recurrent weights W_hh^T, [0]=fwd, [1]=bwd
#   yf_ref  : (TT, B, H)   forward hidden outputs (original time order)
#   yb_ref  : (TT, B, H)   backward hidden outputs (original time order)
#   hN_ref  : (2, B, H)    final hidden states (written on last chunk only)
#   cN_ref  : (2, B, H)    final cell   states (written on last chunk only)
#   h_sc/c_sc : (2, B, H) f32 VMEM scratch carrying state across chunks
# Gate order: i, f, g, o (PyTorch LSTMCell).
# ----------------------------------------------------------------------------
def bilstm_layer_kernel(xgf_ref, xgb_ref, whh_ref, yf_ref, yb_ref,
                        hN_ref, cN_ref, h_sc, c_sc, *, num_steps, unroll):
    c = pl.program_id(0)          # time-chunk index (processing order)
    nc = pl.num_programs(0)
    H = h_sc.shape[-1]

    @pl.when(c == 0)
    def _():
        h_sc[...] = jnp.zeros_like(h_sc)
        c_sc[...] = jnp.zeros_like(c_sc)

    # Hoist weight loads out of the recurrent loop.
    whh_f = whh_ref[0]            # (H, 4H)
    whh_b = whh_ref[1]            # (H, 4H)

    def cell(xg, h, c_state, whh):
        gates = xg.astype(jnp.float32) + jnp.dot(
            h.astype(whh.dtype), whh, preferred_element_type=jnp.float32)
        i_g = jax.nn.sigmoid(gates[:, 0 * H:1 * H])
        f_g = jax.nn.sigmoid(gates[:, 1 * H:2 * H])
        g_g = jnp.tanh(gates[:, 2 * H:3 * H])
        o_g = jax.nn.sigmoid(gates[:, 3 * H:4 * H])
        c_new = f_g * c_state + i_g * g_g
        h_new = o_g * jnp.tanh(c_new)
        return h_new, c_new

    def step(s, carry):
        h_f, c_f, h_b, c_b = carry
        sb = num_steps - 1 - s            # backward walks the chunk reversed
        h_f, c_f = cell(xgf_ref[s], h_f, c_f, whh_f)
        h_b, c_b = cell(xgb_ref[sb], h_b, c_b, whh_b)
        yf_ref[s] = h_f.astype(yf_ref.dtype)
        yb_ref[sb] = h_b.astype(yb_ref.dtype)
        return h_f, c_f, h_b, c_b

    init = (h_sc[0], c_sc[0], h_sc[1], c_sc[1])
    h_f, c_f, h_b, c_b = jax.lax.fori_loop(0, num_steps, step, init,
                                           unroll=unroll)
    h_sc[0] = h_f
    c_sc[0] = c_f
    h_sc[1] = h_b
    c_sc[1] = c_b

    # Final states once, on the last time chunk (both directions finish here:
    # fwd ends at time T-1, bwd ends at time 0).
    @pl.when(c == nc - 1)
    def _():
        hN_ref[0] = h_f.astype(hN_ref.dtype)
        hN_ref[1] = h_b.astype(hN_ref.dtype)
        cN_ref[0] = c_f.astype(cN_ref.dtype)
        cN_ref[1] = c_b.astype(cN_ref.dtype)


def _pick_time_chunk(T):
    for tt in (32, 16, 8, 4, 2, 1):
        if T % tt == 0:
            return tt
    return 1


def bilstm_layer_pallas(x, wih_f, whh_f, b_f, wih_b, whh_b, b_b,
                        *, time_chunk=None):
    """Fused bidirectional LSTM layer over time-major x: (T, B, Din).

    Returns (y, hN, cN):
      y  : (T, B, 2H)  concatenated [fwd, bwd] hidden outputs, original order
      hN : (2, B, H)   final hidden states (0=fwd, 1=bwd)
      cN : (2, B, H)   final cell states
    """
    T, B, Din = x.shape
    H = whh_f.shape[0]
    assert wih_f.shape == (Din, 4 * H) and whh_f.shape == (H, 4 * H)
    assert b_f.shape == (1, 4 * H)

    TT = time_chunk if time_chunk is not None else _pick_time_chunk(T)
    assert T % TT == 0, "time_chunk must divide T"
    nc = T // TT

    # Hoisted input projection: ONE big matmul covering both directions
    # (MXU-friendly); the sequential kernel only carries the recurrence.
    hp = jax.lax.Precision.HIGHEST
    x2d = x.reshape(T * B, Din)
    wih = jnp.concatenate([wih_f, wih_b], axis=1)          # (Din, 8H)
    bias = jnp.concatenate([b_f, b_b], axis=1)             # (1, 8H)
    xg = (jnp.dot(x2d, wih, precision=hp) + bias).reshape(T, B, 8 * H)
    xg_f = xg[..., :4 * H]                                 # (T, B, 4H)
    xg_b = xg[..., 4 * H:]                                 # (T, B, 4H)
    whh = jnp.stack([whh_f, whh_b], axis=0)                # (2, H, 4H)

    kernel = functools.partial(bilstm_layer_kernel, num_steps=TT,
                               unroll=True if TT <= 8 else 2)

    y_f, y_b, hN, cN = pl.pallas_call(
        kernel,
        out_shape=(jax.ShapeDtypeStruct((T, B, H), x.dtype),
                   jax.ShapeDtypeStruct((T, B, H), x.dtype),
                   jax.ShapeDtypeStruct((2, B, H), x.dtype),
                   jax.ShapeDtypeStruct((2, B, H), x.dtype)),
        grid_spec=pltpu.PrefetchScalarGridSpec(
            num_scalar_prefetch=0,
            grid=(nc,),                                    # time chunks
            in_specs=[
                # forward reads chunk c, backward reads chunk nc-1-c
                pl.BlockSpec((TT, B, 4 * H), lambda c: (c, 0, 0)),
                pl.BlockSpec((TT, B, 4 * H), lambda c: (nc - 1 - c, 0, 0)),
                pl.BlockSpec((2, H, 4 * H), lambda c: (0, 0, 0)),
            ],
            out_specs=(
                pl.BlockSpec((TT, B, H), lambda c: (c, 0, 0)),
                pl.BlockSpec((TT, B, H), lambda c: (nc - 1 - c, 0, 0)),
                pl.BlockSpec((2, B, H), lambda c: (0, 0, 0)),
                pl.BlockSpec((2, B, H), lambda c: (0, 0, 0)),
            ),
            scratch_shapes=[pltpu.VMEM((2, B, H), jnp.float32),
                            pltpu.VMEM((2, B, H), jnp.float32)]),
        compiler_params=pltpu.CompilerParams(
            # the time axis is inherently sequential
            dimension_semantics=("arbitrary",)),
    )(xg_f, xg_b, whh)

    y = jnp.concatenate([y_f, y_b], axis=-1)               # (T, B, 2H)
    return y, hN, cN


# ----------------------------------------------------------------------------
# BiLSTM forward (eval mode, equal-length packed sequences).
# Mirrors BiLSTM.forward: returns (packed_output_data, (h_n, c_n)) where
#   packed_output_data : (T*B, 2*hidden_size)
#   h_n, c_n           : (num_layers*2, B, hidden_size)
# ----------------------------------------------------------------------------
def bilstm_forward(packed_data, batch_sizes, params, hidden_size, num_layers,
                   layer_fn=bilstm_layer_pallas):
    B = batch_sizes[0]
    T = len(batch_sizes)
    assert all(bs == B for bs in batch_sizes), "equal-length sequences only"

    x = packed_data.reshape(T, B, -1)
    h_n, c_n = [], []
    for i in range(num_layers):
        wih_f, whh_f, b_f = params["f"][i]
        wih_b, whh_b, b_b = params["b"][i]
        x, hN, cN = layer_fn(x, wih_f, whh_f, b_f, wih_b, whh_b, b_b)
        h_n.append(hN)                               # (2, B, H)
        c_n.append(cN)
    out = x.reshape(T * B, 2 * hidden_size)
    return out, (jnp.concatenate(h_n, 0), jnp.concatenate(c_n, 0))


# ----------------------------------------------------------------------------
# Pure-JAX reference (lax.scan) for correctness checking.
# ----------------------------------------------------------------------------
def _lstm_dir_ref(x, wih_t, whh_t, b, *, reverse):
    H = whh_t.shape[0]
    B = x.shape[1]
    hp = jax.lax.Precision.HIGHEST

    def step(carry, xt):
        h, c = carry
        gates = (jnp.dot(xt, wih_t, precision=hp)
                 + jnp.dot(h, whh_t, precision=hp) + b[0])
        i_g = jax.nn.sigmoid(gates[:, :H])
        f_g = jax.nn.sigmoid(gates[:, H:2 * H])
        g_g = jnp.tanh(gates[:, 2 * H:3 * H])
        o_g = jax.nn.sigmoid(gates[:, 3 * H:])
        c = f_g * c + i_g * g_g
        h = o_g * jnp.tanh(c)
        return (h, c), h

    init = (jnp.zeros((B, H), x.dtype), jnp.zeros((B, H), x.dtype))
    xs = x[::-1] if reverse else x
    (hN, cN), ys = jax.lax.scan(step, init, xs)
    ys = ys[::-1] if reverse else ys
    return ys, hN, cN


def bilstm_layer_ref(x, wih_f, whh_f, b_f, wih_b, whh_b, b_b, **_):
    yf, hf, cf = _lstm_dir_ref(x, wih_f, whh_f, b_f, reverse=False)
    yb, hb, cb = _lstm_dir_ref(x, wih_b, whh_b, b_b, reverse=True)
    return (jnp.concatenate([yf, yb], -1),
            jnp.stack([hf, hb]), jnp.stack([cf, cb]))


# ----------------------------------------------------------------------------
# Deterministic parameter init (mimics reset_parameters: 2-D weights random,
# 1-D biases zero -> combined bias b_ih + b_hh is zero).
# ----------------------------------------------------------------------------
def init_params(key, input_size, hidden_size, num_layers):
    params = {"f": [], "b": []}
    d_in = input_size
    for _ in range(num_layers):
        for direction in ("f", "b"):
            key, k1, k2 = jax.random.split(key, 3)
            wih = jax.random.normal(k1, (4 * hidden_size, d_in), jnp.float32) * 0.3
            whh = jax.random.normal(k2, (4 * hidden_size, hidden_size), jnp.float32) * 0.3
            bias = jnp.zeros((1, 4 * hidden_size), jnp.float32)   # b_ih + b_hh = 0
            params[direction].append((wih.T, whh.T, bias))
        d_in = 2 * hidden_size
    return params


if __name__ == "__main__":
    input_size = 16
    hidden_size = 32
    num_layers = 2
    B = 2
    T = 8
    batch_sizes = [B] * T            # equal-length packed sequence

    key = jax.random.PRNGKey(0)
    k_param, k_data = jax.random.split(key)
    params = init_params(k_param, input_size, hidden_size, num_layers)

    # PackedSequence.data for equal-length seqs: time-major, shape (T*B, input_size)
    packed_data = jax.random.normal(k_data, (T * B, input_size), jnp.float32)

    # time_chunk=4 -> 2 chunks, exercising the cross-chunk scratch carry.
    pallas_layer = functools.partial(bilstm_layer_pallas, time_chunk=4)

    @jax.jit
    def run(data, p):
        return bilstm_forward(data, batch_sizes, p, hidden_size, num_layers,
                              layer_fn=pallas_layer)

    out, (h_n, c_n) = run(packed_data, params)
    jax.block_until_ready((out, h_n, c_n))

    # reference check
    out_ref, (h_ref, c_ref) = bilstm_forward(packed_data, batch_sizes, params,
                                             hidden_size, num_layers,
                                             layer_fn=bilstm_layer_ref)
    assert out.shape == (T * B, 2 * hidden_size)
    assert h_n.shape == (num_layers * 2, B, hidden_size)
    assert c_n.shape == (num_layers * 2, B, hidden_size)
    assert jnp.allclose(out, out_ref, rtol=1e-4, atol=1e-5)
    assert jnp.allclose(h_n, h_ref, rtol=1e-4, atol=1e-5)
    assert jnp.allclose(c_n, c_ref, rtol=1e-4, atol=1e-5)

    print("KERNEL_OK")
</pallas_src>

<mosaic_0001>
module attributes {stable_mosaic.version = 11 : i64} {
  func.func @bilstm_layer_kernel(%arg0: i32, %arg1: memref<4x2x128xf32, #tpu.memory_space<vmem>>, %arg2: memref<4x2x128xf32, #tpu.memory_space<vmem>>, %arg3: memref<2x32x128xf32, #tpu.memory_space<vmem>>, %arg4: memref<4x2x32xf32, #tpu.memory_space<vmem>>, %arg5: memref<4x2x32xf32, #tpu.memory_space<vmem>>, %arg6: memref<2x2x32xf32, #tpu.memory_space<vmem>>, %arg7: memref<2x2x32xf32, #tpu.memory_space<vmem>>, %arg8: memref<2x2x32xf32, #tpu.memory_space<vmem>>, %arg9: memref<2x2x32xf32, #tpu.memory_space<vmem>>) attributes {dimension_semantics = [#tpu.dimension_semantics<arbitrary>], iteration_bounds = array<i64: 2>, scalar_prefetch = 0 : i64, scratch_operands = 2 : i64, tpu.core_type = #tpu.core_type<tc>, window_params = [{transform_indices = @transform_0, window_bounds = array<i64: 4, 2, 128>}, {transform_indices = @transform_1, window_bounds = array<i64: 4, 2, 128>}, {pipeline_mode = #tpu.pipeline_mode<synchronous>, transform_indices = @transform_2, window_bounds = array<i64: 2, 32, 128>}, {transform_indices = @transform_3, window_bounds = array<i64: 4, 2, 32>}, {transform_indices = @transform_4, window_bounds = array<i64: 4, 2, 32>}, {pipeline_mode = #tpu.pipeline_mode<synchronous>, transform_indices = @transform_5, window_bounds = array<i64: 2, 2, 32>}, {pipeline_mode = #tpu.pipeline_mode<synchronous>, transform_indices = @transform_6, window_bounds = array<i64: 2, 2, 32>}]} {
    %c0_i32 = arith.constant 0 : i32
    %0 = arith.cmpi eq, %arg0, %c0_i32 : i32
    %1 = arith.extui %0 : i1 to i32
    %c0_i32_0 = arith.constant 0 : i32
    %2 = arith.cmpi ne, %1, %c0_i32_0 : i32
    scf.if %2 {
      %cst_99 = arith.constant 0.000000e+00 : f32
      %306 = vector.broadcast %cst_99 : f32 to vector<2x2x32xf32>
      %c0_100 = arith.constant 0 : index
      %c0_101 = arith.constant 0 : index
      %c0_102 = arith.constant 0 : index
      %307 = vector.load %arg8[%c0_100, %c0_101, %c0_102] : memref<2x2x32xf32, #tpu.memory_space<vmem>>, vector<2x2x32xf32>
      tpu.vector_store %arg8[%c0_100, %c0_101, %c0_102], %306 {strides = array<i32>} : memref<2x2x32xf32, #tpu.memory_space<vmem>>, vector<2x2x32xf32>,
      %cst_103 = arith.constant 0.000000e+00 : f32
      %308 = vector.broadcast %cst_103 : f32 to vector<2x2x32xf32>
      %c0_104 = arith.constant 0 : index
      %c0_105 = arith.constant 0 : index
      %c0_106 = arith.constant 0 : index
      %309 = vector.load %arg9[%c0_104, %c0_105, %c0_106] : memref<2x2x32xf32, #tpu.memory_space<vmem>>, vector<2x2x32xf32>
      tpu.vector_store %arg9[%c0_104, %c0_105, %c0_106], %308 {strides = array<i32>} : memref<2x2x32xf32, #tpu.memory_space<vmem>>, vector<2x2x32xf32>,
    } else {
    }
    %c0 = arith.constant 0 : index
    %c0_1 = arith.constant 0 : index
    %c0_2 = arith.constant 0 : index
    %3 = vector.load %arg3[%c0, %c0_1, %c0_2] : memref<2x32x128xf32, #tpu.memory_space<vmem>>, vector<1x32x128xf32>
    %4 = vector.shape_cast %3 : vector<1x32x128xf32> to vector<32x128xf32>
    %c1 = arith.constant 1 : index
    %c0_3 = arith.constant 0 : index
    %c0_4 = arith.constant 0 : index
    %5 = vector.load %arg3[%c1, %c0_3, %c0_4] : memref<2x32x128xf32, #tpu.memory_space<vmem>>, vector<1x32x128xf32>
    %6 = vector.shape_cast %5 : vector<1x32x128xf32> to vector<32x128xf32>
    %c0_5 = arith.constant 0 : index
    %c0_6 = arith.constant 0 : index
    %c0_7 = arith.constant 0 : index
    %7 = vector.load %arg8[%c0_5, %c0_6, %c0_7] : memref<2x2x32xf32, #tpu.memory_space<vmem>>, vector<1x2x32xf32>
    %8 = vector.shape_cast %7 : vector<1x2x32xf32> to vector<2x32xf32>
    %c0_8 = arith.constant 0 : index
    %c0_9 = arith.constant 0 : index
    %c0_10 = arith.constant 0 : index
    %9 = vector.load %arg9[%c0_8, %c0_9, %c0_10] : memref<2x2x32xf32, #tpu.memory_space<vmem>>, vector<1x2x32xf32>
    %10 = vector.shape_cast %9 : vector<1x2x32xf32> to vector<2x32xf32>
    %c1_11 = arith.constant 1 : index
    %c0_12 = arith.constant 0 : index
    %c0_13 = arith.constant 0 : index
    %11 = vector.load %arg8[%c1_11, %c0_12, %c0_13] : memref<2x2x32xf32, #tpu.memory_space<vmem>>, vector<1x2x32xf32>
    %12 = vector.shape_cast %11 : vector<1x2x32xf32> to vector<2x32xf32>
    %c1_14 = arith.constant 1 : index
    %c0_15 = arith.constant 0 : index
    %c0_16 = arith.constant 0 : index
    %13 = vector.load %arg9[%c1_14, %c0_15, %c0_16] : memref<2x2x32xf32, #tpu.memory_space<vmem>>, vector<1x2x32xf32>
    %14 = vector.shape_cast %13 : vector<1x2x32xf32> to vector<2x32xf32>
    %c0_i32_17 = arith.constant 0 : i32
    %c3_i32 = arith.constant 3 : i32
    %15 = arith.subi %c3_i32, %c0_i32_17 : i32
    %16 = arith.index_cast %c0_i32_17 : i32 to index
    %c0_18 = arith.constant 0 : index
    %c0_19 = arith.constant 0 : index
    %17 = vector.load %arg1[%16, %c0_18, %c0_19] : memref<4x2x128xf32, #tpu.memory_space<vmem>>, vector<1x2x128xf32>
    %18 = vector.shape_cast %17 : vector<1x2x128xf32> to vector<2x128xf32>
    %cst = arith.constant dense<0.000000e+00> : vector<2x128xf32>
    %19 = tpu.matmul %8, %4, %cst {dimension_numbers = #tpu.dot_dimension_numbers<[1], [0], [0], [1], [0, 0, 1, 1], [], []>} : vector<2x32xf32>, vector<32x128xf32>, vector<2x128xf32> -> vector<2x128xf32>
    %20 = arith.addf %18, %19 : vector<2x128xf32>
    %21 = vector.extract_strided_slice %20 {offsets = [0, 0], sizes = [2, 32], strides = [1, 1]} : vector<2x128xf32> to vector<2x32xf32>
    %22 = arith.negf %21 : vector<2x32xf32>
    %23 = math.exp %22 : vector<2x32xf32>
    %cst_20 = arith.constant 1.000000e+00 : f32
    %24 = vector.broadcast %cst_20 : f32 to vector<2x32xf32>
    %25 = arith.addf %24, %23 : vector<2x32xf32>
    %26 = arith.divf %24, %25 : vector<2x32xf32>
    %27 = vector.extract_strided_slice %20 {offsets = [0, 32], sizes = [2, 32], strides = [1, 1]} : vector<2x128xf32> to vector<2x32xf32>
    %28 = arith.negf %27 : vector<2x32xf32>
    %29 = math.exp %28 : vector<2x32xf32>
    %cst_21 = arith.constant 1.000000e+00 : f32
    %30 = vector.broadcast %cst_21 : f32 to vector<2x32xf32>
    %31 = arith.addf %30, %29 : vector<2x32xf32>
    %32 = arith.divf %30, %31 : vector<2x32xf32>
    %33 = vector.extract_strided_slice %20 {offsets = [0, 64], sizes = [2, 32], strides = [1, 1]} : vector<2x128xf32> to vector<2x32xf32>
    %34 = math.tanh %33 : vector<2x32xf32>
    %35 = vector.extract_strided_slice %20 {offsets = [0, 96], sizes = [2, 32], strides = [1, 1]} : vector<2x128xf32> to vector<2x32xf32>
    %36 = arith.negf %35 : vector<2x32xf32>
    %37 = math.exp %36 : vector<2x32xf32>
    %cst_22 = arith.constant 1.000000e+00 : f32
    %38 = vector.broadcast %cst_22 : f32 to vector<2x32xf32>
    %39 = arith.addf %38, %37 : vector<2x32xf32>
    %40 = arith.divf %38, %39 : vector<2x32xf32>
    %41 = arith.mulf %32, %10 : vector<2x32xf32>
    %42 = arith.mulf %26, %34 : vector<2x32xf32>
    %43 = arith.addf %41, %42 : vector<2x32xf32>
    %44 = math.tanh %43 : vector<2x32xf32>
    %45 = arith.mulf %40, %44 : vector<2x32xf32>
    %46 = arith.index_cast %15 : i32 to index
    %c0_23 = arith.constant 0 : index
    %c0_24 = arith.constant 0 : index
    %47 = vector.load %arg2[%46, %c0_23, %c0_24] : memref<4x2x128xf32, #tpu.memory_space<vmem>>, vector<1x2x128xf32>
    %48 = vector.shape_cast %47 : vector<1x2x128xf32> to vector<2x128xf32>
    %cst_25 = arith.constant dense<0.000000e+00> : vector<2x128xf32>
    %49 = tpu.matmul %12, %6, %cst_25 {dimension_numbers = #tpu.dot_dimension_numbers<[1], [0], [0], [1], [0, 0, 1, 1], [], []>} : vector<2x32xf32>, vector<32x128xf32>, vector<2x128xf32> -> vector<2x128xf32>
    %50 = arith.addf %48, %49 : vector<2x128xf32>
    %51 = vector.extract_strided_slice %50 {offsets = [0, 0], sizes = [2, 32], strides = [1, 1]} : vector<2x128xf32> to vector<2x32xf32>
    %52 = arith.negf %51 : vector<2x32xf32>
    %53 = math.exp %52 : vector<2x32xf32>
    %cst_26 = arith.constant 1.000000e+00 : f32
    %54 = vector.broadcast %cst_26 : f32 to vector<2x32xf32>
    %55 = arith.addf %54, %53 : vector<2x32xf32>
    %56 = arith.divf %54, %55 : vector<2x32xf32>
    %57 = vector.extract_strided_slice %50 {offsets = [0, 32], sizes = [2, 32], strides = [1, 1]} : vector<2x128xf32> to vector<2x32xf32>
    %58 = arith.negf %57 : vector<2x32xf32>
    %59 = math.exp %58 : vector<2x32xf32>
    %cst_27 = arith.constant 1.000000e+00 : f32
    %60 = vector.broadcast %cst_27 : f32 to vector<2x32xf32>
    %61 = arith.addf %60, %59 : vector<2x32xf32>
    %62 = arith.divf %60, %61 : vector<2x32xf32>
    %63 = vector.extract_strided_slice %50 {offsets = [0, 64], sizes = [2, 32], strides = [1, 1]} : vector<2x128xf32> to vector<2x32xf32>
    %64 = math.tanh %63 : vector<2x32xf32>
    %65 = vector.extract_strided_slice %50 {offsets = [0, 96], sizes = [2, 32], strides = [1, 1]} : vector<2x128xf32> to vector<2x32xf32>
    %66 = arith.negf %65 : vector<2x32xf32>
    %67 = math.exp %66 : vector<2x32xf32>
    %cst_28 = arith.constant 1.000000e+00 : f32
    %68 = vector.broadcast %cst_28 : f32 to vector<2x32xf32>
    %69 = arith.addf %68, %67 : vector<2x32xf32>
    %70 = arith.divf %68, %69 : vector<2x32xf32>
    %71 = arith.mulf %62, %14 : vector<2x32xf32>
    %72 = arith.mulf %56, %64 : vector<2x32xf32>
    %73 = arith.addf %71, %72 : vector<2x32xf32>
    %74 = math.tanh %73 : vector<2x32xf32>
    %75 = arith.mulf %70, %74 : vector<2x32xf32>
    %76 = arith.index_cast %c0_i32_17 : i32 to index
    %c0_29 = arith.constant 0 : index
    %c0_30 = arith.constant 0 : index
    %77 = vector.load %arg4[%76, %c0_29, %c0_30] : memref<4x2x32xf32, #tpu.memory_space<vmem>>, vector<1x2x32xf32>
    %78 = vector.shape_cast %77 : vector<1x2x32xf32> to vector<2x32xf32>
    %79 = vector.shape_cast %45 : vector<2x32xf32> to vector<1x2x32xf32>
    tpu.vector_store %arg4[%76, %c0_29, %c0_30], %79 {strides = array<i32>} : memref<4x2x32xf32, #tpu.memory_space<vmem>>, vector<1x2x32xf32>,
    %80 = arith.index_cast %15 : i32 to index
    %c0_31 = arith.constant 0 : index
    %c0_32 = arith.constant 0 : index
    %81 = vector.load %arg5[%80, %c0_31, %c0_32] : memref<4x2x32xf32, #tpu.memory_space<vmem>>, vector<1x2x32xf32>
    %82 = vector.shape_cast %81 : vector<1x2x32xf32> to vector<2x32xf32>
    %83 = vector.shape_cast %75 : vector<2x32xf32> to vector<1x2x32xf32>
    tpu.vector_store %arg5[%80, %c0_31, %c0_32], %83 {strides = array<i32>} : memref<4x2x32xf32, #tpu.memory_space<vmem>>, vector<1x2x32xf32>,
    %c1_i32 = arith.constant 1 : i32
    %c3_i32_33 = arith.constant 3 : i32
    %84 = arith.subi %c3_i32_33, %c1_i32 : i32
    %85 = arith.index_cast %c1_i32 : i32 to index
    %c0_34 = arith.constant 0 : index
    %c0_35 = arith.constant 0 : index
    %86 = vector.load %arg1[%85, %c0_34, %c0_35] : memref<4x2x128xf32, #tpu.memory_space<vmem>>, vector<1x2x128xf32>
    %87 = vector.shape_cast %86 : vector<1x2x128xf32> to vector<2x128xf32>
    %cst_36 = arith.constant dense<0.000000e+00> : vector<2x128xf32>
    %88 = tpu.matmul %45, %4, %cst_36 {dimension_numbers = #tpu.dot_dimension_numbers<[1], [0], [0], [1], [0, 0, 1, 1], [], []>} : vector<2x32xf32>, vector<32x128xf32>, vector<2x128xf32> -> vector<2x128xf32>
    %89 = arith.addf %87, %88 : vector<2x128xf32>
    %90 = vector.extract_strided_slice %89 {offsets = [0, 0], sizes = [2, 32], strides = [1, 1]} : vector<2x128xf32> to vector<2x32xf32>
    %91 = arith.negf %90 : vector<2x32xf32>
    %92 = math.exp %91 : vector<2x32xf32>
    %cst_37 = arith.constant 1.000000e+00 : f32
    %93 = vector.broadcast %cst_37 : f32 to vector<2x32xf32>
    %94 = arith.addf %93, %92 : vector<2x32xf32>
    %95 = arith.divf %93, %94 : vector<2x32xf32>
    %96 = vector.extract_strided_slice %89 {offsets = [0, 32], sizes = [2, 32], strides = [1, 1]} : vector<2x128xf32> to vector<2x32xf32>
    %97 = arith.negf %96 : vector<2x32xf32>
    %98 = math.exp %97 : vector<2x32xf32>
    %cst_38 = arith.constant 1.000000e+00 : f32
    %99 = vector.broadcast %cst_38 : f32 to vector<2x32xf32>
    %100 = arith.addf %99, %98 : vector<2x32xf32>
    %101 = arith.divf %99, %100 : vector<2x32xf32>
    %102 = vector.extract_strided_slice %89 {offsets = [0, 64], sizes = [2, 32], strides = [1, 1]} : vector<2x128xf32> to vector<2x32xf32>
    %103 = math.tanh %102 : vector<2x32xf32>
    %104 = vector.extract_strided_slice %89 {offsets = [0, 96], sizes = [2, 32], strides = [1, 1]} : vector<2x128xf32> to vector<2x32xf32>
    %105 = arith.negf %104 : vector<2x32xf32>
    %106 = math.exp %105 : vector<2x32xf32>
    %cst_39 = arith.constant 1.000000e+00 : f32
    %107 = vector.broadcast %cst_39 : f32 to vector<2x32xf32>
    %108 = arith.addf %107, %106 : vector<2x32xf32>
    %109 = arith.divf %107, %108 : vector<2x32xf32>
    %110 = arith.mulf %101, %43 : vector<2x32xf32>
    %111 = arith.mulf %95, %103 : vector<2x32xf32>
    %112 = arith.addf %110, %111 : vector<2x32xf32>
    %113 = math.tanh %112 : vector<2x32xf32>
    %114 = arith.mulf %109, %113 : vector<2x32xf32>
    %115 = arith.index_cast %84 : i32 to index
    %c0_40 = arith.constant 0 : index
    %c0_41 = arith.constant 0 : index
    %116 = vector.load %arg2[%115, %c0_40, %c0_41] : memref<4x2x128xf32, #tpu.memory_space<vmem>>, vector<1x2x128xf32>
    %117 = vector.shape_cast %116 : vector<1x2x128xf32> to vector<2x128xf32>
    %cst_42 = arith.constant dense<0.000000e+00> : vector<2x128xf32>
    %118 = tpu.matmul %75, %6, %cst_42 {dimension_numbers = #tpu.dot_dimension_numbers<[1], [0], [0], [1], [0, 0, 1, 1], [], []>} : vector<2x32xf32>, vector<32x128xf32>, vector<2x128xf32> -> vector<2x128xf32>
    %119 = arith.addf %117, %118 : vector<2x128xf32>
    %120 = vector.extract_strided_slice %119 {offsets = [0, 0], sizes = [2, 32], strides = [1, 1]} : vector<2x128xf32> to vector<2x32xf32>
    %121 = arith.negf %120 : vector<2x32xf32>
    %122 = math.exp %121 : vector<2x32xf32>
    %cst_43 = arith.constant 1.000000e+00 : f32
    %123 = vector.broadcast %cst_43 : f32 to vector<2x32xf32>
    %124 = arith.addf %123, %122 : vector<2x32xf32>
    %125 = arith.divf %123, %124 : vector<2x32xf32>
    %126 = vector.extract_strided_slice %119 {offsets = [0, 32], sizes = [2, 32], strides = [1, 1]} : vector<2x128xf32> to vector<2x32xf32>
    %127 = arith.negf %126 : vector<2x32xf32>
    %128 = math.exp %127 : vector<2x32xf32>
    %cst_44 = arith.constant 1.000000e+00 : f32
    %129 = vector.broadcast %cst_44 : f32 to vector<2x32xf32>
    %130 = arith.addf %129, %128 : vector<2x32xf32>
    %131 = arith.divf %129, %130 : vector<2x32xf32>
    %132 = vector.extract_strided_slice %119 {offsets = [0, 64], sizes = [2, 32], strides = [1, 1]} : vector<2x128xf32> to vector<2x32xf32>
    %133 = math.tanh %132 : vector<2x32xf32>
    %134 = vector.extract_strided_slice %119 {offsets = [0, 96], sizes = [2, 32], strides = [1, 1]} : vector<2x128xf32> to vector<2x32xf32>
    %135 = arith.negf %134 : vector<2x32xf32>
    %136 = math.exp %135 : vector<2x32xf32>
    %cst_45 = arith.constant 1.000000e+00 : f32
    %137 = vector.broadcast %cst_45 : f32 to vector<2x32xf32>
    %138 = arith.addf %137, %136 : vector<2x32xf32>
    %139 = arith.divf %137, %138 : vector<2x32xf32>
    %140 = arith.mulf %131, %73 : vector<2x32xf32>
    %141 = arith.mulf %125, %133 : vector<2x32xf32>
    %142 = arith.addf %140, %141 : vector<2x32xf32>
    %143 = math.tanh %142 : vector<2x32xf32>
    %144 = arith.mulf %139, %143 : vector<2x32xf32>
    %145 = arith.index_cast %c1_i32 : i32 to index
    %c0_46 = arith.constant 0 : index
    %c0_47 = arith.constant 0 : index
    %146 = vector.load %arg4[%145, %c0_46, %c0_47] : memref<4x2x32xf32, #tpu.memory_space<vmem>>, vector<1x2x32xf32>
    %147 = vector.shape_cast %146 : vector<1x2x32xf32> to vector<2x32xf32>
    %148 = vector.shape_cast %114 : vector<2x32xf32> to vector<1x2x32xf32>
    tpu.vector_store %arg4[%145, %c0_46, %c0_47], %148 {strides = array<i32>} : memref<4x2x32xf32, #tpu.memory_space<vmem>>, vector<1x2x32xf32>,
    %149 = arith.index_cast %84 : i32 to index
    %c0_48 = arith.constant 0 : index
    %c0_49 = arith.constant 0 : index
    %150 = vector.load %arg5[%149, %c0_48, %c0_49] : memref<4x2x32xf32, #tpu.memory_space<vmem>>, vector<1x2x32xf32>
    %151 = vector.shape_cast %150 : vector<1x2x32xf32> to vector<2x32xf32>
    %152 = vector.shape_cast %144 : vector<2x32xf32> to vector<1x2x32xf32>
    tpu.vector_store %arg5[%149, %c0_48, %c0_49], %152 {strides = array<i32>} : memref<4x2x32xf32, #tpu.memory_space<vmem>>, vector<1x2x32xf32>,
    %c2_i32 = arith.constant 2 : i32
    %c3_i32_50 = arith.constant 3 : i32
    %153 = arith.subi %c3_i32_50, %c2_i32 : i32
    %154 = arith.index_cast %c2_i32 : i32 to index
    %c0_51 = arith.constant 0 : index
    %c0_52 = arith.constant 0 : index
    %155 = vector.load %arg1[%154, %c0_51, %c0_52] : memref<4x2x128xf32, #tpu.memory_space<vmem>>, vector<1x2x128xf32>
    %156 = vector.shape_cast %155 : vector<1x2x128xf32> to vector<2x128xf32>
    %cst_53 = arith.constant dense<0.000000e+00> : vector<2x128xf32>
    %157 = tpu.matmul %114, %4, %cst_53 {dimension_numbers = #tpu.dot_dimension_numbers<[1], [0], [0], [1], [0, 0, 1, 1], [], []>} : vector<2x32xf32>, vector<32x128xf32>, vector<2x128xf32> -> vector<2x128xf32>
    %158 = arith.addf %156, %157 : vector<2x128xf32>
    %159 = vector.extract_strided_slice %158 {offsets = [0, 0], sizes = [2, 32], strides = [1, 1]} : vector<2x128xf32> to vector<2x32xf32>
    %160 = arith.negf %159 : vector<2x32xf32>
    %161 = math.exp %160 : vector<2x32xf32>
    %cst_54 = arith.constant 1.000000e+00 : f32
    %162 = vector.broadcast %cst_54 : f32 to vector<2x32xf32>
    %163 = arith.addf %162, %161 : vector<2x32xf32>
    %164 = arith.divf %162, %163 : vector<2x32xf32>
    %165 = vector.extract_strided_slice %158 {offsets = [0, 32], sizes = [2, 32], strides = [1, 1]} : vector<2x128xf32> to vector<2x32xf32>
    %166 = arith.negf %165 : vector<2x32xf32>
    %167 = math.exp %166 : vector<2x32xf32>
    %cst_55 = arith.constant 1.000000e+00 : f32
    %168 = vector.broadcast %cst_55 : f32 to vector<2x32xf32>
    %169 = arith.addf %168, %167 : vector<2x32xf32>
    %170 = arith.divf %168, %169 : vector<2x32xf32>
    %171 = vector.extract_strided_slice %158 {offsets = [0, 64], sizes = [2, 32], strides = [1, 1]} : vector<2x128xf32> to vector<2x32xf32>
    %172 = math.tanh %171 : vector<2x32xf32>
    %173 = vector.extract_strided_slice %158 {offsets = [0, 96], sizes = [2, 32], strides = [1, 1]} : vector<2x128xf32> to vector<2x32xf32>
    %174 = arith.negf %173 : vector<2x32xf32>
    %175 = math.exp %174 : vector<2x32xf32>
    %cst_56 = arith.constant 1.000000e+00 : f32
    %176 = vector.broadcast %cst_56 : f32 to vector<2x32xf32>
    %177 = arith.addf %176, %175 : vector<2x32xf32>
    %178 = arith.divf %176, %177 : vector<2x32xf32>
    %179 = arith.mulf %170, %112 : vector<2x32xf32>
    %180 = arith.mulf %164, %172 : vector<2x32xf32>
    %181 = arith.addf %179, %180 : vector<2x32xf32>
    %182 = math.tanh %181 : vector<2x32xf32>
    %183 = arith.mulf %178, %182 : vector<2x32xf32>
    %184 = arith.index_cast %153 : i32 to index
    %c0_57 = arith.constant 0 : index
    %c0_58 = arith.constant 0 : index
    %185 = vector.load %arg2[%184, %c0_57, %c0_58] : memref<4x2x128xf32, #tpu.memory_space<vmem>>, vector<1x2x128xf32>
    %186 = vector.shape_cast %185 : vector<1x2x128xf32> to vector<2x128xf32>
    %cst_59 = arith.constant dense<0.000000e+00> : vector<2x128xf32>
    %187 = tpu.matmul %144, %6, %cst_59 {dimension_numbers = #tpu.dot_dimension_numbers<[1], [0], [0], [1], [0, 0, 1, 1], [], []>} : vector<2x32xf32>, vector<32x128xf32>, vector<2x128xf32> -> vector<2x128xf32>
    %188 = arith.addf %186, %187 : vector<2x128xf32>
    %189 = vector.extract_strided_slice %188 {offsets = [0, 0], sizes = [2, 32], strides = [1, 1]} : vector<2x128xf32> to vector<2x32xf32>
    %190 = arith.negf %189 : vector<2x32xf32>
    %191 = math.exp %190 : vector<2x32xf32>
    %cst_60 = arith.constant 1.000000e+00 : f32
    %192 = vector.broadcast %cst_60 : f32 to vector<2x32xf32>
    %193 = arith.addf %192, %191 : vector<2x32xf32>
    %194 = arith.divf %192, %193 : vector<2x32xf32>
    %195 = vector.extract_strided_slice %188 {offsets = [0, 32], sizes = [2, 32], strides = [1, 1]} : vector<2x128xf32> to vector<2x32xf32>
    %196 = arith.negf %195 : vector<2x32xf32>
    %197 = math.exp %196 : vector<2x32xf32>
    %cst_61 = arith.constant 1.000000e+00 : f32
    %198 = vector.broadcast %cst_61 : f32 to vector<2x32xf32>
    %199 = arith.addf %198, %197 : vector<2x32xf32>
    %200 = arith.divf %198, %199 : vector<2x32xf32>
    %201 = vector.extract_strided_slice %188 {offsets = [0, 64], sizes = [2, 32], strides = [1, 1]} : vector<2x128xf32> to vector<2x32xf32>
    %202 = math.tanh %201 : vector<2x32xf32>
    %203 = vector.extract_strided_slice %188 {offsets = [0, 96], sizes = [2, 32], strides = [1, 1]} : vector<2x128xf32> to vector<2x32xf32>
    %204 = arith.negf %203 : vector<2x32xf32>
    %205 = math.exp %204 : vector<2x32xf32>
    %cst_62 = arith.constant 1.000000e+00 : f32
    %206 = vector.broadcast %cst_62 : f32 to vector<2x32xf32>
    %207 = arith.addf %206, %205 : vector<2x32xf32>
    %208 = arith.divf %206, %207 : vector<2x32xf32>
    %209 = arith.mulf %200, %142 : vector<2x32xf32>
    %210 = arith.mulf %194, %202 : vector<2x32xf32>
    %211 = arith.addf %209, %210 : vector<2x32xf32>
    %212 = math.tanh %211 : vector<2x32xf32>
    %213 = arith.mulf %208, %212 : vector<2x32xf32>
    %214 = arith.index_cast %c2_i32 : i32 to index
    %c0_63 = arith.constant 0 : index
    %c0_64 = arith.constant 0 : index
    %215 = vector.load %arg4[%214, %c0_63, %c0_64] : memref<4x2x32xf32, #tpu.memory_space<vmem>>, vector<1x2x32xf32>
    %216 = vector.shape_cast %215 : vector<1x2x32xf32> to vector<2x32xf32>
    %217 = vector.shape_cast %183 : vector<2x32xf32> to vector<1x2x32xf32>
    tpu.vector_store %arg4[%214, %c0_63, %c0_64], %217 {strides = array<i32>} : memref<4x2x32xf32, #tpu.memory_space<vmem>>, vector<1x2x32xf32>,
    %218 = arith.index_cast %153 : i32 to index
    %c0_65 = arith.constant 0 : index
    %c0_66 = arith.constant 0 : index
    %219 = vector.load %arg5[%218, %c0_65, %c0_66] : memref<4x2x32xf32, #tpu.memory_space<vmem>>, vector<1x2x32xf32>
    %220 = vector.shape_cast %219 : vector<1x2x32xf32> to vector<2x32xf32>
    %221 = vector.shape_cast %213 : vector<2x32xf32> to vector<1x2x32xf32>
    tpu.vector_store %arg5[%218, %c0_65, %c0_66], %221 {strides = array<i32>} : memref<4x2x32xf32, #tpu.memory_space<vmem>>, vector<1x2x32xf32>,
    %c3_i32_67 = arith.constant 3 : i32
    %c3_i32_68 = arith.constant 3 : i32
    %222 = arith.subi %c3_i32_68, %c3_i32_67 : i32
    %223 = arith.index_cast %c3_i32_67 : i32 to index
    %c0_69 = arith.constant 0 : index
    %c0_70 = arith.constant 0 : index
    %224 = vector.load %arg1[%223, %c0_69, %c0_70] : memref<4x2x128xf32, #tpu.memory_space<vmem>>, vector<1x2x128xf32>
    %225 = vector.shape_cast %224 : vector<1x2x128xf32> to vector<2x128xf32>
    %cst_71 = arith.constant dense<0.000000e+00> : vector<2x128xf32>
    %226 = tpu.matmul %183, %4, %cst_71 {dimension_numbers = #tpu.dot_dimension_numbers<[1], [0], [0], [1], [0, 0, 1, 1], [], []>} : vector<2x32xf32>, vector<32x128xf32>, vector<2x128xf32> -> vector<2x128xf32>
    %227 = arith.addf %225, %226 : vector<2x128xf32>
    %228 = vector.extract_strided_slice %227 {offsets = [0, 0], sizes = [2, 32], strides = [1, 1]} : vector<2x128xf32> to vector<2x32xf32>
    %229 = arith.negf %228 : vector<2x32xf32>
    %230 = math.exp %229 : vector<2x32xf32>
    %cst_72 = arith.constant 1.000000e+00 : f32
    %231 = vector.broadcast %cst_72 : f32 to vector<2x32xf32>
    %232 = arith.addf %231, %230 : vector<2x32xf32>
    %233 = arith.divf %231, %232 : vector<2x32xf32>
    %234 = vector.extract_strided_slice %227 {offsets = [0, 32], sizes = [2, 32], strides = [1, 1]} : vector<2x128xf32> to vector<2x32xf32>
    %235 = arith.negf %234 : vector<2x32xf32>
    %236 = math.exp %235 : vector<2x32xf32>
    %cst_73 = arith.constant 1.000000e+00 : f32
    %237 = vector.broadcast %cst_73 : f32 to vector<2x32xf32>
    %238 = arith.addf %237, %236 : vector<2x32xf32>
    %239 = arith.divf %237, %238 : vector<2x32xf32>
    %240 = vector.extract_strided_slice %227 {offsets = [0, 64], sizes = [2, 32], strides = [1, 1]} : vector<2x128xf32> to vector<2x32xf32>
    %241 = math.tanh %240 : vector<2x32xf32>
    %242 = vector.extract_strided_slice %227 {offsets = [0, 96], sizes = [2, 32], strides = [1, 1]} : vector<2x128xf32> to vector<2x32xf32>
    %243 = arith.negf %242 : vector<2x32xf32>
    %244 = math.exp %243 : vector<2x32xf32>
    %cst_74 = arith.constant 1.000000e+00 : f32
    %245 = vector.broadcast %cst_74 : f32 to vector<2x32xf32>
    %246 = arith.addf %245, %244 : vector<2x32xf32>
    %247 = arith.divf %245, %246 : vector<2x32xf32>
    %248 = arith.mulf %239, %181 : vector<2x32xf32>
    %249 = arith.mulf %233, %241 : vector<2x32xf32>
    %250 = arith.addf %248, %249 : vector<2x32xf32>
    %251 = math.tanh %250 : vector<2x32xf32>
    %252 = arith.mulf %247, %251 : vector<2x32xf32>
    %253 = arith.index_cast %222 : i32 to index
    %c0_75 = arith.constant 0 : index
    %c0_76 = arith.constant 0 : index
    %254 = vector.load %arg2[%253, %c0_75, %c0_76] : memref<4x2x128xf32, #tpu.memory_space<vmem>>, vector<1x2x128xf32>
    %255 = vector.shape_cast %254 : vector<1x2x128xf32> to vector<2x128xf32>
    %cst_77 = arith.constant dense<0.000000e+00> : vector<2x128xf32>
    %256 = tpu.matmul %213, %6, %cst_77 {dimension_numbers = #tpu.dot_dimension_numbers<[1], [0], [0], [1], [0, 0, 1, 1], [], []>} : vector<2x32xf32>, vector<32x128xf32>, vector<2x128xf32> -> vector<2x128xf32>
    %257 = arith.addf %255, %256 : vector<2x128xf32>
    %258 = vector.extract_strided_slice %257 {offsets = [0, 0], sizes = [2, 32], strides = [1, 1]} : vector<2x128xf32> to vector<2x32xf32>
    %259 = arith.negf %258 : vector<2x32xf32>
    %260 = math.exp %259 : vector<2x32xf32>
    %cst_78 = arith.constant 1.000000e+00 : f32
    %261 = vector.broadcast %cst_78 : f32 to vector<2x32xf32>
    %262 = arith.addf %261, %260 : vector<2x32xf32>
    %263 = arith.divf %261, %262 : vector<2x32xf32>
    %264 = vector.extract_strided_slice %257 {offsets = [0, 32], sizes = [2, 32], strides = [1, 1]} : vector<2x128xf32> to vector<2x32xf32>
    %265 = arith.negf %264 : vector<2x32xf32>
    %266 = math.exp %265 : vector<2x32xf32>
    %cst_79 = arith.constant 1.000000e+00 : f32
    %267 = vector.broadcast %cst_79 : f32 to vector<2x32xf32>
    %268 = arith.addf %267, %266 : vector<2x32xf32>
    %269 = arith.divf %267, %268 : vector<2x32xf32>
    %270 = vector.extract_strided_slice %257 {offsets = [0, 64], sizes = [2, 32], strides = [1, 1]} : vector<2x128xf32> to vector<2x32xf32>
    %271 = math.tanh %270 : vector<2x32xf32>
    %272 = vector.extract_strided_slice %257 {offsets = [0, 96], sizes = [2, 32], strides = [1, 1]} : vector<2x128xf32> to vector<2x32xf32>
    %273 = arith.negf %272 : vector<2x32xf32>
    %274 = math.exp %273 : vector<2x32xf32>
    %cst_80 = arith.constant 1.000000e+00 : f32
    %275 = vector.broadcast %cst_80 : f32 to vector<2x32xf32>
    %276 = arith.addf %275, %274 : vector<2x32xf32>
    %277 = arith.divf %275, %276 : vector<2x32xf32>
    %278 = arith.mulf %269, %211 : vector<2x32xf32>
    %279 = arith.mulf %263, %271 : vector<2x32xf32>
    %280 = arith.addf %278, %279 : vector<2x32xf32>
    %281 = math.tanh %280 : vector<2x32xf32>
    %282 = arith.mulf %277, %281 : vector<2x32xf32>
    %283 = arith.index_cast %c3_i32_67 : i32 to index
    %c0_81 = arith.constant 0 : index
    %c0_82 = arith.constant 0 : index
    %284 = vector.load %arg4[%283, %c0_81, %c0_82] : memref<4x2x32xf32, #tpu.memory_space<vmem>>, vector<1x2x32xf32>
    %285 = vector.shape_cast %284 : vector<1x2x32xf32> to vector<2x32xf32>
    %286 = vector.shape_cast %252 : vector<2x32xf32> to vector<1x2x32xf32>
    tpu.vector_store %arg4[%283, %c0_81, %c0_82], %286 {strides = array<i32>} : memref<4x2x32xf32, #tpu.memory_space<vmem>>, vector<1x2x32xf32>,
    %287 = arith.index_cast %222 : i32 to index
    %c0_83 = arith.constant 0 : index
    %c0_84 = arith.constant 0 : index
    %288 = vector.load %arg5[%287, %c0_83, %c0_84] : memref<4x2x32xf32, #tpu.memory_space<vmem>>, vector<1x2x32xf32>
    %289 = vector.shape_cast %288 : vector<1x2x32xf32> to vector<2x32xf32>
    %290 = vector.shape_cast %282 : vector<2x32xf32> to vector<1x2x32xf32>
    tpu.vector_store %arg5[%287, %c0_83, %c0_84], %290 {strides = array<i32>} : memref<4x2x32xf32, #tpu.memory_space<vmem>>, vector<1x2x32xf32>,
    %c4_i32 = arith.constant 4 : i32
    %c0_85 = arith.constant 0 : index
    %c0_86 = arith.constant 0 : index
    %c0_87 = arith.constant 0 : index
    %291 = vector.load %arg8[%c0_85, %c0_86, %c0_87] : memref<2x2x32xf32, #tpu.memory_space<vmem>>, vector<1x2x32xf32>
    %292 = vector.shape_cast %291 : vector<1x2x32xf32> to vector<2x32xf32>
    %293 = vector.shape_cast %252 : vector<2x32xf32> to vector<1x2x32xf32>
    tpu.vector_store %arg8[%c0_85, %c0_86, %c0_87], %293 {strides = array<i32>} : memref<2x2x32xf32, #tpu.memory_space<vmem>>, vector<1x2x32xf32>,
    %c0_88 = arith.constant 0 : index
    %c0_89 = arith.constant 0 : index
    %c0_90 = arith.constant 0 : index
    %294 = vector.load %arg9[%c0_88, %c0_89, %c0_90] : memref<2x2x32xf32, #tpu.memory_space<vmem>>, vector<1x2x32xf32>
    %295 = vector.shape_cast %294 : vector<1x2x32xf32> to vector<2x32xf32>
    %296 = vector.shape_cast %250 : vector<2x32xf32> to vector<1x2x32xf32>
    tpu.vector_store %arg9[%c0_88, %c0_89, %c0_90], %296 {strides = array<i32>} : memref<2x2x32xf32, #tpu.memory_space<vmem>>, vector<1x2x32xf32>,
    %c1_91 = arith.constant 1 : index
    %c0_92 = arith.constant 0 : index
    %c0_93 = arith.constant 0 : index
    %297 = vector.load %arg8[%c1_91, %c0_92, %c0_93] : memref<2x2x32xf32, #tpu.memory_space<vmem>>, vector<1x2x32xf32>
    %298 = vector.shape_cast %297 : vector<1x2x32xf32> to vector<2x32xf32>
    %299 = vector.shape_cast %282 : vector<2x32xf32> to vector<1x2x32xf32>
    tpu.vector_store %arg8[%c1_91, %c0_92, %c0_93], %299 {strides = array<i32>} : memref<2x2x32xf32, #tpu.memory_space<vmem>>, vector<1x2x32xf32>,
    %c1_94 = arith.constant 1 : index
    %c0_95 = arith.constant 0 : index
    %c0_96 = arith.constant 0 : index
    %300 = vector.load %arg9[%c1_94, %c0_95, %c0_96] : memref<2x2x32xf32, #tpu.memory_space<vmem>>, vector<1x2x32xf32>
    %301 = vector.shape_cast %300 : vector<1x2x32xf32> to vector<2x32xf32>
    %302 = vector.shape_cast %280 : vector<2x32xf32> to vector<1x2x32xf32>
    tpu.vector_store %arg9[%c1_94, %c0_95, %c0_96], %302 {strides = array<i32>} : memref<2x2x32xf32, #tpu.memory_space<vmem>>, vector<1x2x32xf32>,
    %c1_i32_97 = arith.constant 1 : i32
    %303 = arith.cmpi eq, %arg0, %c1_i32_97 : i32
    %304 = arith.extui %303 : i1 to i32
    %c0_i32_98 = arith.constant 0 : i32
    %305 = arith.cmpi ne, %304, %c0_i32_98 : i32
    scf.if %305 {
      %c0_99 = arith.constant 0 : index
      %c0_100 = arith.constant 0 : index
      %c0_101 = arith.constant 0 : index
      %306 = vector.load %arg6[%c0_99, %c0_100, %c0_101] : memref<2x2x32xf32, #tpu.memory_space<vmem>>, vector<1x2x32xf32>
      %307 = vector.shape_cast %306 : vector<1x2x32xf32> to vector<2x32xf32>
      %308 = vector.shape_cast %252 : vector<2x32xf32> to vector<1x2x32xf32>
      tpu.vector_store %arg6[%c0_99, %c0_100, %c0_101], %308 {strides = array<i32>} : memref<2x2x32xf32, #tpu.memory_space<vmem>>, vector<1x2x32xf32>,
      %c1_102 = arith.constant 1 : index
      %c0_103 = arith.constant 0 : index
      %c0_104 = arith.constant 0 : index
      %309 = vector.load %arg6[%c1_102, %c0_103, %c0_104] : memref<2x2x32xf32, #tpu.memory_space<vmem>>, vector<1x2x32xf32>
      %310 = vector.shape_cast %309 : vector<1x2x32xf32> to vector<2x32xf32>
      %311 = vector.shape_cast %282 : vector<2x32xf32> to vector<1x2x32xf32>
      tpu.vector_store %arg6[%c1_102, %c0_103, %c0_104], %311 {strides = array<i32>} : memref<2x2x32xf32, #tpu.memory_space<vmem>>, vector<1x2x32xf32>,
      %c0_105 = arith.constant 0 : index
      %c0_106 = arith.constant 0 : index
      %c0_107 = arith.constant 0 : index
      %312 = vector.load %arg7[%c0_105, %c0_106, %c0_107] : memref<2x2x32xf32, #tpu.memory_space<vmem>>, vector<1x2x32xf32>
      %313 = vector.shape_cast %312 : vector<1x2x32xf32> to vector<2x32xf32>
      %314 = vector.shape_cast %250 : vector<2x32xf32> to vector<1x2x32xf32>
      tpu.vector_store %arg7[%c0_105, %c0_106, %c0_107], %314 {strides = array<i32>} : memref<2x2x32xf32, #tpu.memory_space<vmem>>, vector<1x2x32xf32>,
      %c1_108 = arith.constant 1 : index
      %c0_109 = arith.constant 0 : index
      %c0_110 = arith.constant 0 : index
      %315 = vector.load %arg7[%c1_108, %c0_109, %c0_110] : memref<2x2x32xf32, #tpu.memory_space<vmem>>, vector<1x2x32xf32>
      %316 = vector.shape_cast %315 : vector<1x2x32xf32> to vector<2x32xf32>
      %317 = vector.shape_cast %280 : vector<2x32xf32> to vector<1x2x32xf32>
      tpu.vector_store %arg7[%c1_108, %c0_109, %c0_110], %317 {strides = array<i32>} : memref<2x2x32xf32, #tpu.memory_space<vmem>>, vector<1x2x32xf32>,
    } else {
    }
    return
  }
  func.func @transform_0(%arg0: i32) -> (i32, i32, i32) {
    %c0_i32 = arith.constant 0 : i32
    %c0_i32_0 = arith.constant 0 : i32
    %c0_i32_1 = arith.constant 0 : i32
    return %arg0, %c0_i32, %c0_i32_0 : i32, i32, i32
  }
  func.func @transform_1(%arg0: i32) -> (i32, i32, i32) {
    %c1_i32 = arith.constant 1 : i32
    %0 = arith.subi %c1_i32, %arg0 : i32
    %c0_i32 = arith.constant 0 : i32
    %c0_i32_0 = arith.constant 0 : i32
    %c0_i32_1 = arith.constant 0 : i32
    return %0, %c0_i32, %c0_i32_0 : i32, i32, i32
  }
  func.func @transform_2(%arg0: i32) -> (i32, i32, i32) {
    %c0_i32 = arith.constant 0 : i32
    %c0_i32_0 = arith.constant 0 : i32
    %c0_i32_1 = arith.constant 0 : i32
    %c0_i32_2 = arith.constant 0 : i32
    return %c0_i32, %c0_i32_0, %c0_i32_1 : i32, i32, i32
  }
  func.func @transform_3(%arg0: i32) -> (i32, i32, i32) {
    %c0_i32 = arith.constant 0 : i32
    %c0_i32_0 = arith.constant 0 : i32
    %c0_i32_1 = arith.constant 0 : i32
    return %arg0, %c0_i32, %c0_i32_0 : i32, i32, i32
  }
  func.func @transform_4(%arg0: i32) -> (i32, i32, i32) {
    %c1_i32 = arith.constant 1 : i32
    %0 = arith.subi %c1_i32, %arg0 : i32
    %c0_i32 = arith.constant 0 : i32
    %c0_i32_0 = arith.constant 0 : i32
    %c0_i32_1 = arith.constant 0 : i32
    return %0, %c0_i32, %c0_i32_0 : i32, i32, i32
  }
  func.func @transform_5(%arg0: i32) -> (i32, i32, i32) {
    %c0_i32 = arith.constant 0 : i32
    %c0_i32_0 = arith.constant 0 : i32
    %c0_i32_1 = arith.constant 0 : i32
    %c0_i32_2 = arith.constant 0 : i32
    return %c0_i32, %c0_i32_0, %c0_i32_1 : i32, i32, i32
  }
  func.func @transform_6(%arg0: i32) -> (i32, i32, i32) {
    %c0_i32 = arith.constant 0 : i32
    %c0_i32_0 = arith.constant 0 : i32
    %c0_i32_1 = arith.constant 0 : i32
    %c0_i32_2 = arith.constant 0 : i32
    return %c0_i32, %c0_i32_0, %c0_i32_1 : i32, i32, i32
  }
}

</mosaic_0001>

<llo_original>
// kernel: run.2
$region0: #{run.2}
  #allocation0 [shape = 'u32[]', space=smem, size = 0x4, offset = 0x4, fixed_abs, tag = 'smem constant byte address 0x4 - core index']
  #allocation1 [shape = 'u32[144,128]{1,0:T(1,128)}', space=vmem, size = 0x12000, scoped, tag = 'internal scratch']
  #allocation2 [shape = 'f32[2,2,32]{2,1,0:T(2,128)}', space=vmem, size = 0x800, scoped, tag = 'scratch operand']
  #allocation3 [shape = 'f32[2,2,32]{2,1,0:T(2,128)}', space=vmem, size = 0x800, scoped, tag = 'scratch operand']
  %s0 = inlined_call_operand.vmem [shape: f32[8,2,128], index: 0, kind: input, shape index: {}]
  %s1 = inlined_call_operand.vmem [shape: f32[8,2,128], index: 1, kind: input, shape index: {}]
  %s2 = inlined_call_operand.vmem [shape: f32[2,32,128], index: 2, kind: input, shape index: {}]
  %s3 = inlined_call_operand.vmem [shape: f32[8,2,32], index: 3, kind: output, shape index: {0}]
  %s4 = inlined_call_operand.vmem [shape: f32[8,2,32], index: 4, kind: output, shape index: {1}]
  %s5 = inlined_call_operand.vmem [shape: f32[2,2,32], index: 5, kind: output, shape index: {2}]
  %s6 = inlined_call_operand.vmem [shape: f32[2,2,32], index: 6, kind: output, shape index: {3}]
  %7 = xla_tuple %s3, %s4, %s5, %s6
  %s8 = sld [smem:[#allocation0]]
  $region77: #{run.2} parent=0
    _
  %s10 = ssub.s32 1, %s8
  %s11 = scalar_select 0, %s10, %s8
  loop: start=0, step=1, limit=4
  $region2: #{run.2} parent=0 // loop_pre_header
    _
  $region3: #{run.2} parent=0 // loop_header
    %s13 = sphi 0, %s17
    %p14 = scmp.ge.s32.totalorder %s13, 4
    %s23 = sphi 0, %s25
    %s26 = sphi 0, %s23
    %s27 = sphi 0, %s26
    %s43 = sphi 0, %s27
    %s51 = sphi 0, %s53
    %s54 = sphi 0, %s51
    %s55 = sphi 0, %s54
    %s71 = sphi 0, %s55
    %s75 = sphi 0, %s75
    %s77 = sphi 0, %s75
    %s78 = sphi 0, %s77
    %s92 = sphi 0, %s78
    %s98 = sphi 0, %s100
    %s101 = sphi 0, %s98
    %s102 = sphi 0, %s101
    %s118 = sphi 0, %s102
    %s126 = sphi 0, %s128
    %s129 = sphi 0, %s126
    %s130 = sphi 0, %s129
    %s146 = sphi 0, %s130
    %s150 = sphi 0, %s150
    %s152 = sphi 0, %s150
    %s153 = sphi 0, %s152
    %s167 = sphi 0, %s153
    %s171 = sphi 0, %s171
    %s173 = sphi 0, %s171
    %s174 = sphi 0, %s173
    %s188 = sphi 0, %s174
  $region4: #{run.2} parent=0 // loop_header_branch
    %16 = sbr.rel (%p14) target = $region8
  $region5: #{run.2} parent=0 // loop_body
    %s18 = ssub.s32 %s13, 1
    %s19 = ssub.s32 %s13, 2
    %s20 = sadd.s32 %s13, 1
    %s21 = ssub.s32 %s13, %s20
    %p22 = scmp.eq.s32.totalorder %s21, 0
    %s24 = sadd.s32 %s23, 1
    %s25 = scalar_select %p22, %s23, %s24
    %p28 = pneg %p22
    %p29 = scmp.eq.s32.totalorder %s13, 1
    %p30 = por %p28, %p29
    %p31 = scmp.ne.s32.totalorder %s23, %s26
    %p32 = scmp.eq.s32.totalorder %s13, 0
    %p33 = por %p31, %p32
    %p34 = scmp.ne.s32.totalorder %s23, %s26
    %p35 = scmp.eq.s32.totalorder %s18, 1
    %p36 = por %p34, %p35
    %p37 = scmp.ne.s32.totalorder %s26, %s27
    %p38 = scmp.eq.s32.totalorder %s18, 0
    %p39 = por %p37, %p38
    %p40 = scmp.ne.s32.totalorder %s26, %s27
    %p41 = scmp.eq.s32.totalorder %s19, 1
    %p42 = por %p40, %p41
    %p44 = scmp.ne.s32.totalorder %s27, %s43
    %p45 = scmp.eq.s32.totalorder %s19, 0
    %p46 = por %p44, %p45
    %s47 = ssub.s32 1, %s13
    %s48 = ssub.s32 1, %s20
    %s49 = ssub.s32 %s47, %s48
    %p50 = scmp.eq.s32.totalorder %s49, 0
    %s52 = sadd.s32 %s51, 1
    %s53 = scalar_select %p50, %s51, %s52
    %p56 = pneg %p50
    %p57 = scmp.eq.s32.totalorder %s13, 1
    %p58 = por %p56, %p57
    %p59 = scmp.ne.s32.totalorder %s51, %s54
    %p60 = scmp.eq.s32.totalorder %s13, 0
    %p61 = por %p59, %p60
    %p62 = scmp.ne.s32.totalorder %s51, %s54
    %p63 = scmp.eq.s32.totalorder %s18, 1
    %p64 = por %p62, %p63
    %p65 = scmp.ne.s32.totalorder %s54, %s55
    %p66 = scmp.eq.s32.totalorder %s18, 0
    %p67 = por %p65, %p66
    %p68 = scmp.ne.s32.totalorder %s54, %s55
    %p69 = scmp.eq.s32.totalorder %s19, 1
    %p70 = por %p68, %p69
    %p72 = scmp.ne.s32.totalorder %s55, %s71
    %p73 = scmp.eq.s32.totalorder %s19, 0
    %p74 = por %p72, %p73
    %s76 = sadd.s32 %s75, 1
    %p79 = scmp.eq.s32.totalorder %s13, 1
    %p80 = scmp.ne.s32.totalorder %s75, %s77
    %p81 = scmp.eq.s32.totalorder %s13, 0
    %p82 = por %p80, %p81
    %p83 = scmp.ne.s32.totalorder %s75, %s77
    %p84 = scmp.eq.s32.totalorder %s18, 1
    %p85 = por %p83, %p84
    %p86 = scmp.ne.s32.totalorder %s77, %s78
    %p87 = scmp.eq.s32.totalorder %s18, 0
    %p88 = por %p86, %p87
    %p89 = scmp.ne.s32.totalorder %s77, %s78
    %p90 = scmp.eq.s32.totalorder %s19, 1
    %p91 = por %p89, %p90
    %p93 = scmp.ne.s32.totalorder %s78, %s92
    %p94 = scmp.eq.s32.totalorder %s19, 0
    %p95 = por %p93, %p94
    %s96 = ssub.s32 %s13, %s20
    %p97 = scmp.eq.s32.totalorder %s96, 0
    %s99 = sadd.s32 %s98, 1
    %s100 = scalar_select %p97, %s98, %s99
    %p103 = pneg %p97
    %p104 = scmp.eq.s32.totalorder %s13, 1
    %p105 = por %p103, %p104
    %p106 = scmp.ne.s32.totalorder %s98, %s101
    %p107 = scmp.eq.s32.totalorder %s13, 0
    %p108 = por %p106, %p107
    %p109 = scmp.ne.s32.totalorder %s98, %s101
    %p110 = scmp.eq.s32.totalorder %s18, 1
    %p111 = por %p109, %p110
    %p112 = scmp.ne.s32.totalorder %s101, %s102
    %p113 = scmp.eq.s32.totalorder %s18, 0
    %p114 = por %p112, %p113
    %p115 = scmp.ne.s32.totalorder %s101, %s102
    %p116 = scmp.eq.s32.totalorder %s19, 1
    %p117 = por %p115, %p116
    %p119 = scmp.ne.s32.totalorder %s102, %s118
    %p120 = scmp.eq.s32.totalorder %s19, 0
    %p121 = por %p119, %p120
    %s122 = ssub.s32 1, %s13
    %s123 = ssub.s32 1, %s20
    %s124 = ssub.s32 %s122, %s123
    %p125 = scmp.eq.s32.totalorder %s124, 0
    %s127 = sadd.s32 %s126, 1
    %s128 = scalar_select %p125, %s126, %s127
    %p131 = pneg %p125
    %p132 = scmp.eq.s32.totalorder %s13, 1
    %p133 = por %p131, %p132
    %p134 = scmp.ne.s32.totalorder %s126, %s129
    %p135 = scmp.eq.s32.totalorder %s13, 0
    %p136 = por %p134, %p135
    %p137 = scmp.ne.s32.totalorder %s126, %s129
    %p138 = scmp.eq.s32.totalorder %s18, 1
    %p139 = por %p137, %p138
    %p140 = scmp.ne.s32.totalorder %s129, %s130
    %p141 = scmp.eq.s32.totalorder %s18, 0
    %p142 = por %p140, %p141
    %p143 = scmp.ne.s32.totalorder %s129, %s130
    %p144 = scmp.eq.s32.totalorder %s19, 1
    %p145 = por %p143, %p144
    %p147 = scmp.ne.s32.totalorder %s130, %s146
    %p148 = scmp.eq.s32.totalorder %s19, 0
    %p149 = por %p147, %p148
    %s151 = sadd.s32 %s150, 1
    %p154 = scmp.eq.s32.totalorder %s13, 1
    %p155 = scmp.ne.s32.totalorder %s150, %s152
    %p156 = scmp.eq.s32.totalorder %s13, 0
    %p157 = por %p155, %p156
    %p158 = scmp.ne.s32.totalorder %s150, %s152
    %p159 = scmp.eq.s32.totalorder %s18, 1
    %p160 = por %p158, %p159
    %p161 = scmp.ne.s32.totalorder %s152, %s153
    %p162 = scmp.eq.s32.totalorder %s18, 0
    %p163 = por %p161, %p162
    %p164 = scmp.ne.s32.totalorder %s152, %s153
    %p165 = scmp.eq.s32.totalorder %s19, 1
    %p166 = por %p164, %p165
    %p168 = scmp.ne.s32.totalorder %s153, %s167
    %p169 = scmp.eq.s32.totalorder %s19, 0
    %p170 = por %p168, %p169
    %s172 = sadd.s32 %s171, 1
    %p175 = scmp.eq.s32.totalorder %s13, 1
    %p176 = scmp.ne.s32.totalorder %s171, %s173
    %p177 = scmp.eq.s32.totalorder %s13, 0
    %p178 = por %p176, %p177
    %p179 = scmp.ne.s32.totalorder %s171, %s173
    %p180 = scmp.eq.s32.totalorder %s18, 1
    %p181 = por %p179, %p180
    %p182 = scmp.ne.s32.totalorder %s173, %s174
    %p183 = scmp.eq.s32.totalorder %s18, 0
    %p184 = por %p182, %p183
    %p185 = scmp.ne.s32.totalorder %s173, %s174
    %p186 = scmp.eq.s32.totalorder %s19, 1
    %p187 = por %p185, %p186
    %p189 = scmp.ne.s32.totalorder %s174, %s188
    %p190 = scmp.eq.s32.totalorder %s19, 0
    %p191 = por %p189, %p190
    %p192 = scmp.le.s32.totalorder 1, %s13
    %p193 = scmp.lt.s32.totalorder %s13, 3
    %p194 = pnand %p192, %p193
    %p195 = pneg %p194
    // Predicated region
    $region9: #{run.2} parent=5 // pred_check
      _
    $region10: #{run.2} parent=5 // pred_check_branch
      %197 = sbr.rel (%p194) target = $region12
    $region11: #{run.2} parent=5 // pred_region
      %s198 = ssub.s32 %s13, 1
      // Predicated region
      $region13: #{run.2} parent=11 // pred_check
        %p199 = pneg %p88
      $region14: #{run.2} parent=11 // pred_check_branch
        %201 = sbr.rel (%p199) target = $region16
      $region15: #{run.2} parent=11 // pred_region
        _
      $region16: #{run.2} parent=11 // pred_fallthru
        _
    $region12: #{run.2} parent=5 // pred_fallthru
      _
    %p202 = scmp.lt.s32.totalorder %s13, 2
    // Predicated region
    $region17: #{run.2} parent=5 // pred_check
      %p203 = pneg %p202
    $region18: #{run.2} parent=5 // pred_check_branch
      %205 = sbr.rel (%p203) target = $region20
    $region19: #{run.2} parent=5 // pred_region
      // Predicated region
      $region21: #{run.2} parent=19 // pred_check
        %p206 = pneg %p33
      $region22: #{run.2} parent=19 // pred_check_branch
        %208 = sbr.rel (%p206) target = $region24
      $region23: #{run.2} parent=19 // pred_region
        %s209 = smul.u32 4, %s13
        %p210 = scmp.lt.s32.totalorder %s209, 7
        %s211 = scalar_select %p210, %s209, 7
        %s212 = smul.addr %s211, 2
        %s213 = scalar_lea.vmem %s0, %s212
        %s214 = smul.u32 4, %s13
      $region24: #{run.2} parent=19 // pred_fallthru
        _
      // Predicated region
      $region25: #{run.2} parent=19 // pred_check
        %p215 = pneg %p61
      $region26: #{run.2} parent=19 // pred_check_branch
        %217 = sbr.rel (%p215) target = $region28
      $region27: #{run.2} parent=19 // pred_region
        %s218 = ssub.s32 1, %s13
        %s219 = smul.u32 4, %s218
        %p220 = scmp.lt.s32.totalorder %s219, 7
        %s221 = scalar_select %p220, %s219, 7
        %s222 = smul.addr %s221, 2
        %s223 = scalar_lea.vmem %s1, %s222
        %s224 = ssub.s32 1, %s13
        %s225 = smul.u32 4, %s224
      $region28: #{run.2} parent=19 // pred_fallthru
        _
    $region20: #{run.2} parent=5 // pred_fallthru
      _
    %p226 = scmp.le.s32.totalorder 1, %s13
    %p227 = scmp.lt.s32.totalorder %s13, 3
    %p228 = pnand %p226, %p227
    %p229 = pneg %p228
    // Predicated region
    $region29: #{run.2} parent=5 // pred_check
      _
    $region30: #{run.2} parent=5 // pred_check_branch
      %231 = sbr.rel (%p228) target = $region32
    $region31: #{run.2} parent=5 // pred_region
      %s232 = ssub.s32 %s13, 1
      %s233 = smul.u32 4, %s18
      %p234 = scmp.lt.s32.totalorder %s233, 7
      %s235 = scalar_select %p234, %s233, 7
      %s236 = smul.addr %s235, 2
      %s237 = scalar_lea.vmem %s0, %s236
      %p238 = pneg %p39
      %p239 = pneg %p36
      %s240 = ssub.s32 1, %s18
      %s241 = smul.u32 4, %s240
      %p242 = scmp.lt.s32.totalorder %s241, 7
      %s243 = scalar_select %p242, %s241, 7
      %s244 = smul.addr %s243, 2
      %s245 = scalar_lea.vmem %s1, %s244
      %p246 = pneg %p67
      %p247 = pneg %p64
      %p248 = pneg %p88
      %p249 = pneg %p85
      %p250 = pneg %p114
      %p251 = pneg %p111
      %s252 = smul.u32 4, %s18
      %p253 = scmp.lt.s32.totalorder %s252, 7
      %s254 = scalar_select %p253, %s252, 7
      %s255 = smul.addr %s254, 2
      %s256 = scalar_lea.vmem %s3, %s255
      %p257 = pneg %p142
      %p258 = pneg %p139
      %s259 = ssub.s32 1, %s18
      %s260 = smul.u32 4, %s259
      %p261 = scmp.lt.s32.totalorder %s260, 7
      %s262 = scalar_select %p261, %s260, 7
      %s263 = smul.addr %s262, 2
      %s264 = scalar_lea.vmem %s4, %s263
      %p265 = pneg %p163
      %p266 = pneg %p160
      %p267 = pneg %p184
      %p268 = pneg %p181
      %s269 = smul.u32 4, %s18
      %p270 = scmp.lt.s32.totalorder %s269, 7
      %s271 = scalar_select %p270, %s269, 7
      %s272 = smul.addr %s271, 2
      %s273 = scalar_lea.vmem %s0, %s272
      %s274 = smul.u32 4, %s18
      %s275 = ssub.s32 1, %s18
      %s276 = smul.u32 4, %s275
      %p277 = scmp.lt.s32.totalorder %s276, 7
      %s278 = scalar_select %p277, %s276, 7
      %s279 = smul.addr %s278, 2
      %s280 = scalar_lea.vmem %s1, %s279
      %s281 = ssub.s32 1, %s18
      %s282 = smul.u32 4, %s281
      %s283 = smul.u32 4, %s18
      %p284 = scmp.lt.s32.totalorder %s283, 7
      %s285 = scalar_select %p284, %s283, 7
      %s286 = smul.addr %s285, 2
      %s287 = scalar_lea.vmem %s3, %s286
      %s288 = smul.u32 4, %s18
      %s289 = ssub.s32 1, %s18
      %s290 = smul.u32 4, %s289
      %p291 = scmp.lt.s32.totalorder %s290, 7
      %s292 = scalar_select %p291, %s290, 7
      %s293 = smul.addr %s292, 2
      %s294 = scalar_lea.vmem %s4, %s293
      %s295 = ssub.s32 1, %s18
      %s296 = smul.u32 4, %s295
      %p297 = scmp.eq.s32.totalorder %s18, 0
      // Predicated region
      $region33: #{run.2} parent=31 // pred_check
        %p298 = pneg %p297
      $region34: #{run.2} parent=31 // pred_check_branch
        %300 = sbr.rel (%p298) target = $region36
      $region35: #{run.2} parent=31 // pred_region
        %vm301 = vcmask 254976
        %302 = vst.msk [vmem:[#allocation2] sm:$0x3] %vm301, 0.0
        %303 = vst.msk [vmem:[#allocation2 + $0x2] sm:$0x3] %vm301, 0.0
        %304 = vst.msk [vmem:[#allocation3] sm:$0x3] %vm301, 0.0
        %305 = vst.msk [vmem:[#allocation3 + $0x2] sm:$0x3] %vm301, 0.0
      $region36: #{run.2} parent=31 // pred_fallthru
        _
      %v306 = vld [vmem:[%s2] sm:$0xff]
      %v307 = vld [vmem:[%s2 + $0x8] sm:$0xff]
      %v308 = vld [vmem:[%s2 + $0x10] sm:$0xff]
      %v309 = vld [vmem:[%s2 + $0x18] sm:$0xff]
      %s310 = scalar_lea.vmem %s2, 32
      %v311 = vld [vmem:[%s310] sm:$0xff]
      %v312 = vld [vmem:[%s310 + $0x8] sm:$0xff]
      %v313 = vld [vmem:[%s310 + $0x10] sm:$0xff]
      %v314 = vld [vmem:[%s310 + $0x18] sm:$0xff]
      %v315 = vld [vmem:[#allocation2] sm:$0x3]
      %v316 = vld [vmem:[#allocation3] sm:$0x3]
      %s317 = scalar_lea.vmem [#allocation2], 2
      %v318 = vld [vmem:[%s317] sm:$0x3]
      %s319 = scalar_lea.vmem [#allocation3], 2
      %v320 = vld [vmem:[%s319] sm:$0x3]
      %v321 = vld [vmem:[%s273] sm:$0x3]
      %vm322 = vcmask 261120
      %v324 = vsel %vm322, %v315, 0
      %326 = vmatprep.subr.mxu0 0.0
      %327 = vmatpush1.msra.mxu0 %v306
      %328 = vmatprep.subr.mxu0 0.0
      %329 = vmatpush1.msra.mxu0 %v307
      %330 = vmatprep.subr.mxu0 0.0
      %331 = vmatpush1.msra.mxu0 %v308
      %332 = vmatprep.subr.mxu0 0.0
      %333 = vmatpush1.msra.mxu0 %v309
      %334 = vmatprep.subr.mxu0 0.0
      %335 = vmatpush1.msra.mxu0 0.0
      %336 = vmatprep.subr.mxu0 0.0
      %337 = vmatpush1.msra.mxu0 0.0
      %338 = vmatprep.subr.mxu0 0.0
      %339 = vmatpush1.msra.mxu0 0.0
      %340 = vmatprep.subr.mxu0 0.0
      %341 = vmatpush1.msra.mxu0 0.0
      %342 = vmatprep.subr.mxu0 0.0
      %343 = vmatpush1.msra.mxu0 0.0
      %344 = vmatprep.subr.mxu0 0.0
      %345 = vmatpush1.msra.mxu0 0.0
      %346 = vmatprep.subr.mxu0 0.0
      %347 = vmatpush1.msra.mxu0 0.0
      %348 = vmatprep.subr.mxu0 0.0
      %349 = vmatpush1.msra.mxu0 0.0
      %350 = vmatprep.subr.mxu0 0.0
      %351 = vmatpush1.msra.mxu0 0.0
      %352 = vmatprep.subr.mxu0 0.0
      %353 = vmatpush1.msra.mxu0 0.0
      %354 = vmatprep.subr.mxu0 0.0
      %355 = vmatpush1.msra.mxu0 0.0
      %356 = vmatprep.subr.mxu0 0.0
      %357 = vmatpush1.msra.mxu0 0.0
      %358 = vmatprep.subr.mxu0 0.0
      %359 = vmatpush1.msra.mxu0 0.0
      %360 = vmatprep.subr.mxu0 0.0
      %361 = vmatpush1.msra.mxu0 0.0
      %362 = vmatprep.subr.mxu0 0.0
      %363 = vmatpush1.msra.mxu0 0.0
      %364 = vmatprep.subr.mxu0 0.0
      %365 = vmatpush1.msra.mxu0 0.0
      %366 = vmatprep.subr.mxu0 0.0
      %367 = vmatpush1.msra.mxu0 0.0
      %368 = vmatprep.subr.mxu0 0.0
      %369 = vmatpush1.msra.mxu0 0.0
      %370 = vmatprep.subr.mxu0 0.0
      %371 = vmatpush1.msra.mxu0 0.0
      %372 = vmatprep.subr.mxu0 0.0
      %373 = vmatpush1.msra.mxu0 0.0
      %374 = vmatprep.subr.mxu0 0.0
      %375 = vmatpush1.msra.mxu0 0.0
      %376 = vmatprep.subr.mxu0 0.0
      %377 = vmatpush1.msra.mxu0 0.0
      %378 = vmatprep.subr.mxu0 0.0
      %379 = vmatpush1.msra.mxu0 0.0
      %380 = vmatprep.subr.mxu0 0.0
      %381 = vmatpush1.msra.mxu0 0.0
      %382 = vmatprep.subr.mxu0 0.0
      %383 = vmatpush1.msra.mxu0 0.0
      %384 = vmatprep.subr.mxu0 0.0
      %385 = vmatpush1.msra.mxu0 0.0
      %386 = vmatprep.subr.mxu0 0.0
      %387 = vmatpush1.msra.mxu0 0.0
      %388 = vmatprep.subr.mxu0 0.0
      %389 = vmatpush1.msra.mxu0 0.0
      %390 = vmatprep.mubr.f32.mxu0 0.0
      %391 = vmatmul.mubr.f32.gmra.mrb[0].mxu0 %v324
      %v392 = vpop.f32.mrb[0].mxu0
      %v393 = vadd.f32 0.0, %v392
      %v394 = vpop.f32.mrb[0].mxu0
      %395 = vdwg.mxu0
      %v396 = vadd.f32 %v321, %v393
      %v397 = vxor.u32 %v396, 2147483648
      %v398 = vmul.f32 %v397, 1.442695
      %v399 = vpow.pop %v398
      %v400 = vadd.f32 %v399, 1.0
      %v401 = vrcp.pop %v400
      %v402 = vmul.f32 1.0, %v401
      %v403 = vtanh.pop %v396
      %405 = vrot.lane.b32.xlu0 %v316, 32
      %v406 = vpop.permute.xlu0 %405
      %v408 = vmul.f32 %v402, %v406
      %410 = vrot.lane.b32.xlu0 %v403, 64
      %v411 = vpop.permute.xlu0 %410
      %v413 = vmul.f32 %v402, %v411
      %415 = vrot.lane.b32.xlu0 %v413, 32
      %v416 = vpop.permute.xlu0 %415
      %v418 = vadd.f32 %v408, %v416
      %v419 = vtanh.pop %v418
      %421 = vrot.lane.b32.xlu0 %v419, 64
      %v422 = vpop.permute.xlu0 %421
      %v424 = vmul.f32 %v402, %v422
      %s425 = scalar_lea.vmem %s280, 6
      %v426 = vld [vmem:[%s425] sm:$0x3]
      %v428 = vsel %vm322, %v318, 0
      %430 = vmatprep.subr.mxu0 0.0
      %431 = vmatpush1.msra.mxu0 %v311
      %432 = vmatprep.subr.mxu0 0.0
      %433 = vmatpush1.msra.mxu0 %v312
      %434 = vmatprep.subr.mxu0 0.0
      %435 = vmatpush1.msra.mxu0 %v313
      %436 = vmatprep.subr.mxu0 0.0
      %437 = vmatpush1.msra.mxu0 %v314
      %438 = vmatprep.subr.mxu0 0.0
      %439 = vmatpush1.msra.mxu0 0.0
      %440 = vmatprep.subr.mxu0 0.0
      %441 = vmatpush1.msra.mxu0 0.0
      %442 = vmatprep.subr.mxu0 0.0
      %443 = vmatpush1.msra.mxu0 0.0
      %444 = vmatprep.subr.mxu0 0.0
      %445 = vmatpush1.msra.mxu0 0.0
      %446 = vmatprep.subr.mxu0 0.0
      %447 = vmatpush1.msra.mxu0 0.0
      %448 = vmatprep.subr.mxu0 0.0
      %449 = vmatpush1.msra.mxu0 0.0
      %450 = vmatprep.subr.mxu0 0.0
      %451 = vmatpush1.msra.mxu0 0.0
      %452 = vmatprep.subr.mxu0 0.0
      %453 = vmatpush1.msra.mxu0 0.0
      %454 = vmatprep.subr.mxu0 0.0
      %455 = vmatpush1.msra.mxu0 0.0
      %456 = vmatprep.subr.mxu0 0.0
      %457 = vmatpush1.msra.mxu0 0.0
      %458 = vmatprep.subr.mxu0 0.0
      %459 = vmatpush1.msra.mxu0 0.0
      %460 = vmatprep.subr.mxu0 0.0
      %461 = vmatpush1.msra.mxu0 0.0
      %462 = vmatprep.subr.mxu0 0.0
      %463 = vmatpush1.msra.mxu0 0.0
      %464 = vmatprep.subr.mxu0 0.0
      %465 = vmatpush1.msra.mxu0 0.0
      %466 = vmatprep.subr.mxu0 0.0
      %467 = vmatpush1.msra.mxu0 0.0
      %468 = vmatprep.subr.mxu0 0.0
      %469 = vmatpush1.msra.mxu0 0.0
      %470 = vmatprep.subr.mxu0 0.0
      %471 = vmatpush1.msra.mxu0 0.0
      %472 = vmatprep.subr.mxu0 0.0
      %473 = vmatpush1.msra.mxu0 0.0
      %474 = vmatprep.subr.mxu0 0.0
      %475 = vmatpush1.msra.mxu0 0.0
      %476 = vmatprep.subr.mxu0 0.0
      %477 = vmatpush1.msra.mxu0 0.0
      %478 = vmatprep.subr.mxu0 0.0
      %479 = vmatpush1.msra.mxu0 0.0
      %480 = vmatprep.subr.mxu0 0.0
      %481 = vmatpush1.msra.mxu0 0.0
      %482 = vmatprep.subr.mxu0 0.0
      %483 = vmatpush1.msra.mxu0 0.0
      %484 = vmatprep.subr.mxu0 0.0
      %485 = vmatpush1.msra.mxu0 0.0
      %486 = vmatprep.subr.mxu0 0.0
      %487 = vmatpush1.msra.mxu0 0.0
      %488 = vmatprep.subr.mxu0 0.0
      %489 = vmatpush1.msra.mxu0 0.0
      %490 = vmatprep.subr.mxu0 0.0
      %491 = vmatpush1.msra.mxu0 0.0
      %492 = vmatprep.subr.mxu0 0.0
      %493 = vmatpush1.msra.mxu0 0.0
      %494 = vmatprep.mubr.f32.mxu0 0.0
      %495 = vmatmul.mubr.f32.gmra.mrb[0].mxu0 %v428
      %v496 = vpop.f32.mrb[0].mxu0
      %v497 = vadd.f32 0.0, %v496
      %v498 = vpop.f32.mrb[0].mxu0
      %499 = vdwg.mxu0
      %v500 = vadd.f32 %v426, %v497
      %v501 = vxor.u32 %v500, 2147483648
      %v502 = vmul.f32 %v501, 1.442695
      %v503 = vpow.pop %v502
      %v504 = vadd.f32 %v503, 1.0
      %v505 = vrcp.pop %v504
      %v506 = vmul.f32 1.0, %v505
      %v507 = vtanh.pop %v500
      %509 = vrot.lane.b32.xlu0 %v320, 32
      %v510 = vpop.permute.xlu0 %509
      %v512 = vmul.f32 %v506, %v510
      %514 = vrot.lane.b32.xlu0 %v507, 64
      %v515 = vpop.permute.xlu0 %514
      %v517 = vmul.f32 %v506, %v515
      %519 = vrot.lane.b32.xlu0 %v517, 32
      %v520 = vpop.permute.xlu0 %519
      %v522 = vadd.f32 %v512, %v520
      %v523 = vtanh.pop %v522
      %525 = vrot.lane.b32.xlu0 %v523, 64
      %v526 = vpop.permute.xlu0 %525
      %v528 = vmul.f32 %v506, %v526
      %530 = vrot.lane.b32.xlu0 %v424, 32
      %v531 = vpop.permute.xlu0 %530
      %vm533 = vcmask 254976
      %534 = vst.msk [vmem:[%s287] sm:$0x3] %vm533, %v531
      %536 = vrot.lane.b32.xlu0 %v528, 32
      %v537 = vpop.permute.xlu0 %536
      %s539 = scalar_lea.vmem %s294, 6
      %540 = vst.msk [vmem:[%s539] sm:$0x3] %vm533, %v537
      %s541 = scalar_lea.vmem %s273, 2
      %v542 = vld [vmem:[%s541] sm:$0x3]
      %v543 = vsel %vm322, %v531, 0
      %545 = vmatprep.subr.mxu0 0.0
      %546 = vmatpush1.msra.mxu0 %v306
      %547 = vmatprep.subr.mxu0 0.0
      %548 = vmatpush1.msra.mxu0 %v307
      %549 = vmatprep.subr.mxu0 0.0
      %550 = vmatpush1.msra.mxu0 %v308
      %551 = vmatprep.subr.mxu0 0.0
      %552 = vmatpush1.msra.mxu0 %v309
      %553 = vmatprep.subr.mxu0 0.0
      %554 = vmatpush1.msra.mxu0 0.0
      %555 = vmatprep.subr.mxu0 0.0
      %556 = vmatpush1.msra.mxu0 0.0
      %557 = vmatprep.subr.mxu0 0.0
      %558 = vmatpush1.msra.mxu0 0.0
      %559 = vmatprep.subr.mxu0 0.0
      %560 = vmatpush1.msra.mxu0 0.0
      %561 = vmatprep.subr.mxu0 0.0
      %562 = vmatpush1.msra.mxu0 0.0
      %563 = vmatprep.subr.mxu0 0.0
      %564 = vmatpush1.msra.mxu0 0.0
      %565 = vmatprep.subr.mxu0 0.0
      %566 = vmatpush1.msra.mxu0 0.0
      %567 = vmatprep.subr.mxu0 0.0
      %568 = vmatpush1.msra.mxu0 0.0
      %569 = vmatprep.subr.mxu0 0.0
      %570 = vmatpush1.msra.mxu0 0.0
      %571 = vmatprep.subr.mxu0 0.0
      %572 = vmatpush1.msra.mxu0 0.0
      %573 = vmatprep.subr.mxu0 0.0
      %574 = vmatpush1.msra.mxu0 0.0
      %575 = vmatprep.subr.mxu0 0.0
      %576 = vmatpush1.msra.mxu0 0.0
      %577 = vmatprep.subr.mxu0 0.0
      %578 = vmatpush1.msra.mxu0 0.0
      %579 = vmatprep.subr.mxu0 0.0
      %580 = vmatpush1.msra.mxu0 0.0
      %581 = vmatprep.subr.mxu0 0.0
      %582 = vmatpush1.msra.mxu0 0.0
      %583 = vmatprep.subr.mxu0 0.0
      %584 = vmatpush1.msra.mxu0 0.0
      %585 = vmatprep.subr.mxu0 0.0
      %586 = vmatpush1.msra.mxu0 0.0
      %587 = vmatprep.subr.mxu0 0.0
      %588 = vmatpush1.msra.mxu0 0.0
      %589 = vmatprep.subr.mxu0 0.0
      %590 = vmatpush1.msra.mxu0 0.0
      %591 = vmatprep.subr.mxu0 0.0
      %592 = vmatpush1.msra.mxu0 0.0
      %593 = vmatprep.subr.mxu0 0.0
      %594 = vmatpush1.msra.mxu0 0.0
      %595 = vmatprep.subr.mxu0 0.0
      %596 = vmatpush1.msra.mxu0 0.0
      %597 = vmatprep.subr.mxu0 0.0
      %598 = vmatpush1.msra.mxu0 0.0
      %599 = vmatprep.subr.mxu0 0.0
      %600 = vmatpush1.msra.mxu0 0.0
      %601 = vmatprep.subr.mxu0 0.0
      %602 = vmatpush1.msra.mxu0 0.0
      %603 = vmatprep.subr.mxu0 0.0
      %604 = vmatpush1.msra.mxu0 0.0
      %605 = vmatprep.subr.mxu0 0.0
      %606 = vmatpush1.msra.mxu0 0.0
      %607 = vmatprep.subr.mxu0 0.0
      %608 = vmatpush1.msra.mxu0 0.0
      %609 = vmatprep.mubr.f32.mxu0 0.0
      %610 = vmatmul.mubr.f32.gmra.mrb[0].mxu0 %v543
      %v611 = vpop.f32.mrb[0].mxu0
      %v612 = vadd.f32 0.0, %v611
      %v613 = vpop.f32.mrb[0].mxu0
      %614 = vdwg.mxu0
      %v615 = vadd.f32 %v542, %v612
      %v616 = vxor.u32 %v615, 2147483648
      %v617 = vmul.f32 %v616, 1.442695
      %v618 = vpow.pop %v617
      %v619 = vadd.f32 %v618, 1.0
      %v620 = vrcp.pop %v619
      %v621 = vmul.f32 1.0, %v620
      %v622 = vtanh.pop %v615
      %v623 = vmul.f32 %v621, %v418
      %625 = vrot.lane.b32.xlu0 %v622, 64
      %v626 = vpop.permute.xlu0 %625
      %v628 = vmul.f32 %v621, %v626
      %630 = vrot.lane.b32.xlu0 %v628, 32
      %v631 = vpop.permute.xlu0 %630
      %v633 = vadd.f32 %v623, %v631
      %v634 = vtanh.pop %v633
      %636 = vrot.lane.b32.xlu0 %v634, 64
      %v637 = vpop.permute.xlu0 %636
      %v639 = vmul.f32 %v621, %v637
      %s640 = scalar_lea.vmem %s280, 4
      %v641 = vld [vmem:[%s640] sm:$0x3]
      %v642 = vsel %vm322, %v537, 0
      %644 = vmatprep.subr.mxu0 0.0
      %645 = vmatpush1.msra.mxu0 %v311
      %646 = vmatprep.subr.mxu0 0.0
      %647 = vmatpush1.msra.mxu0 %v312
      %648 = vmatprep.subr.mxu0 0.0
      %649 = vmatpush1.msra.mxu0 %v313
      %650 = vmatprep.subr.mxu0 0.0
      %651 = vmatpush1.msra.mxu0 %v314
      %652 = vmatprep.subr.mxu0 0.0
      %653 = vmatpush1.msra.mxu0 0.0
      %654 = vmatprep.subr.mxu0 0.0
      %655 = vmatpush1.msra.mxu0 0.0
      %656 = vmatprep.subr.mxu0 0.0
      %657 = vmatpush1.msra.mxu0 0.0
      %658 = vmatprep.subr.mxu0 0.0
      %659 = vmatpush1.msra.mxu0 0.0
      %660 = vmatprep.subr.mxu0 0.0
      %661 = vmatpush1.msra.mxu0 0.0
      %662 = vmatprep.subr.mxu0 0.0
      %663 = vmatpush1.msra.mxu0 0.0
      %664 = vmatprep.subr.mxu0 0.0
      %665 = vmatpush1.msra.mxu0 0.0
      %666 = vmatprep.subr.mxu0 0.0
      %667 = vmatpush1.msra.mxu0 0.0
      %668 = vmatprep.subr.mxu0 0.0
      %669 = vmatpush1.msra.mxu0 0.0
      %670 = vmatprep.subr.mxu0 0.0
      %671 = vmatpush1.msra.mxu0 0.0
      %672 = vmatprep.subr.mxu0 0.0
      %673 = vmatpush1.msra.mxu0 0.0
      %674 = vmatprep.subr.mxu0 0.0
      %675 = vmatpush1.msra.mxu0 0.0
      %676 = vmatprep.subr.mxu0 0.0
      %677 = vmatpush1.msra.mxu0 0.0
      %678 = vmatprep.subr.mxu0 0.0
      %679 = vmatpush1.msra.mxu0 0.0
      %680 = vmatprep.subr.mxu0 0.0
      %681 = vmatpush1.msra.mxu0 0.0
      %682 = vmatprep.subr.mxu0 0.0
      %683 = vmatpush1.msra.mxu0 0.0
      %684 = vmatprep.subr.mxu0 0.0
      %685 = vmatpush1.msra.mxu0 0.0
      %686 = vmatprep.subr.mxu0 0.0
      %687 = vmatpush1.msra.mxu0 0.0
      %688 = vmatprep.subr.mxu0 0.0
      %689 = vmatpush1.msra.mxu0 0.0
      %690 = vmatprep.subr.mxu0 0.0
      %691 = vmatpush1.msra.mxu0 0.0
      %692 = vmatprep.subr.mxu0 0.0
      %693 = vmatpush1.msra.mxu0 0.0
      %694 = vmatprep.subr.mxu0 0.0
      %695 = vmatpush1.msra.mxu0 0.0
      %696 = vmatprep.subr.mxu0 0.0
      %697 = vmatpush1.msra.mxu0 0.0
      %698 = vmatprep.subr.mxu0 0.0
      %699 = vmatpush1.msra.mxu0 0.0
      %700 = vmatprep.subr.mxu0 0.0
      %701 = vmatpush1.msra.mxu0 0.0
      %702 = vmatprep.subr.mxu0 0.0
      %703 = vmatpush1.msra.mxu0 0.0
      %704 = vmatprep.subr.mxu0 0.0
      %705 = vmatpush1.msra.mxu0 0.0
      %706 = vmatprep.subr.mxu0 0.0
      %707 = vmatpush1.msra.mxu0 0.0
      %708 = vmatprep.mubr.f32.mxu0 0.0
      %709 = vmatmul.mubr.f32.gmra.mrb[0].mxu0 %v642
      %v710 = vpop.f32.mrb[0].mxu0
      %v711 = vadd.f32 0.0, %v710
      %v712 = vpop.f32.mrb[0].mxu0
      %713 = vdwg.mxu0
      %v714 = vadd.f32 %v641, %v711
      %v715 = vxor.u32 %v714, 2147483648
      %v716 = vmul.f32 %v715, 1.442695
      %v717 = vpow.pop %v716
      %v718 = vadd.f32 %v717, 1.0
      %v719 = vrcp.pop %v718
      %v720 = vmul.f32 1.0, %v719
      %v721 = vtanh.pop %v714
      %v722 = vmul.f32 %v720, %v522
      %724 = vrot.lane.b32.xlu0 %v721, 64
      %v725 = vpop.permute.xlu0 %724
      %v727 = vmul.f32 %v720, %v725
      %729 = vrot.lane.b32.xlu0 %v727, 32
      %v730 = vpop.permute.xlu0 %729
      %v732 = vadd.f32 %v722, %v730
      %v733 = vtanh.pop %v732
      %735 = vrot.lane.b32.xlu0 %v733, 64
      %v736 = vpop.permute.xlu0 %735
      %v738 = vmul.f32 %v720, %v736
      %740 = vrot.lane.b32.xlu0 %v639, 32
      %v741 = vpop.permute.xlu0 %740
      %s743 = scalar_lea.vmem %s287, 2
      %744 = vst.msk [vmem:[%s743] sm:$0x3] %vm533, %v741
      %746 = vrot.lane.b32.xlu0 %v738, 32
      %v747 = vpop.permute.xlu0 %746
      %s749 = scalar_lea.vmem %s294, 4
      %750 = vst.msk [vmem:[%s749] sm:$0x3] %vm533, %v747
      %s751 = scalar_lea.vmem %s273, 4
      %v752 = vld [vmem:[%s751] sm:$0x3]
      %v753 = vsel %vm322, %v741, 0
      %755 = vmatprep.subr.mxu0 0.0
      %756 = vmatpush1.msra.mxu0 %v306
      %757 = vmatprep.subr.mxu0 0.0
      %758 = vmatpush1.msra.mxu0 %v307
      %759 = vmatprep.subr.mxu0 0.0
      %760 = vmatpush1.msra.mxu0 %v308
      %761 = vmatprep.subr.mxu0 0.0
      %762 = vmatpush1.msra.mxu0 %v309
      %763 = vmatprep.subr.mxu0 0.0
      %764 = vmatpush1.msra.mxu0 0.0
      %765 = vmatprep.subr.mxu0 0.0
      %766 = vmatpush1.msra.mxu0 0.0
      %767 = vmatprep.subr.mxu0 0.0
      %768 = vmatpush1.msra.mxu0 0.0
      %769 = vmatprep.subr.mxu0 0.0
      %770 = vmatpush1.msra.mxu0 0.0
      %771 = vmatprep.subr.mxu0 0.0
      %772 = vmatpush1.msra.mxu0 0.0
      %773 = vmatprep.subr.mxu0 0.0
      %774 = vmatpush1.msra.mxu0 0.0
      %775 = vmatprep.subr.mxu0 0.0
      %776 = vmatpush1.msra.mxu0 0.0
      %777 = vmatprep.subr.mxu0 0.0
      %778 = vmatpush1.msra.mxu0 0.0
      %779 = vmatprep.subr.mxu0 0.0
      %780 = vmatpush1.msra.mxu0 0.0
      %781 = vmatprep.subr.mxu0 0.0
      %782 = vmatpush1.msra.mxu0 0.0
      %783 = vmatprep.subr.mxu0 0.0
      %784 = vmatpush1.msra.mxu0 0.0
      %785 = vmatprep.subr.mxu0 0.0
      %786 = vmatpush1.msra.mxu0 0.0
      %787 = vmatprep.subr.mxu0 0.0
      %788 = vmatpush1.msra.mxu0 0.0
      %789 = vmatprep.subr.mxu0 0.0
      %790 = vmatpush1.msra.mxu0 0.0
      %791 = vmatprep.subr.mxu0 0.0
      %792 = vmatpush1.msra.mxu0 0.0
      %793 = vmatprep.subr.mxu0 0.0
      %794 = vmatpush1.msra.mxu0 0.0
      %795 = vmatprep.subr.mxu0 0.0
      %796 = vmatpush1.msra.mxu0 0.0
      %797 = vmatprep.subr.mxu0 0.0
      %798 = vmatpush1.msra.mxu0 0.0
      %799 = vmatprep.subr.mxu0 0.0
      %800 = vmatpush1.msra.mxu0 0.0
      %801 = vmatprep.subr.mxu0 0.0
      %802 = vmatpush1.msra.mxu0 0.0
      %803 = vmatprep.subr.mxu0 0.0
      %804 = vmatpush1.msra.mxu0 0.0
      %805 = vmatprep.subr.mxu0 0.0
      %806 = vmatpush1.msra.mxu0 0.0
      %807 = vmatprep.subr.mxu0 0.0
      %808 = vmatpush1.msra.mxu0 0.0
      %809 = vmatprep.subr.mxu0 0.0
      %810 = vmatpush1.msra.mxu0 0.0
      %811 = vmatprep.subr.mxu0 0.0
      %812 = vmatpush1.msra.mxu0 0.0
      %813 = vmatprep.subr.mxu0 0.0
      %814 = vmatpush1.msra.mxu0 0.0
      %815 = vmatprep.subr.mxu0 0.0
      %816 = vmatpush1.msra.mxu0 0.0
      %817 = vmatprep.subr.mxu0 0.0
      %818 = vmatpush1.msra.mxu0 0.0
      %819 = vmatprep.mubr.f32.mxu0 0.0
      %820 = vmatmul.mubr.f32.gmra.mrb[0].mxu0 %v753
      %v821 = vpop.f32.mrb[0].mxu0
      %v822 = vadd.f32 0.0, %v821
      %v823 = vpop.f32.mrb[0].mxu0
      %824 = vdwg.mxu0
      %v825 = vadd.f32 %v752, %v822
      %v826 = vxor.u32 %v825, 2147483648
      %v827 = vmul.f32 %v826, 1.442695
      %v828 = vpow.pop %v827
      %v829 = vadd.f32 %v828, 1.0
      %v830 = vrcp.pop %v829
      %v831 = vmul.f32 1.0, %v830
      %v832 = vtanh.pop %v825
      %v833 = vmul.f32 %v831, %v633
      %835 = vrot.lane.b32.xlu0 %v832, 64
      %v836 = vpop.permute.xlu0 %835
      %v838 = vmul.f32 %v831, %v836
      %840 = vrot.lane.b32.xlu0 %v838, 32
      %v841 = vpop.permute.xlu0 %840
      %v843 = vadd.f32 %v833, %v841
      %v844 = vtanh.pop %v843
      %846 = vrot.lane.b32.xlu0 %v844, 64
      %v847 = vpop.permute.xlu0 %846
      %v849 = vmul.f32 %v831, %v847
      %s850 = scalar_lea.vmem %s280, 2
      %v851 = vld [vmem:[%s850] sm:$0x3]
      %v852 = vsel %vm322, %v747, 0
      %854 = vmatprep.subr.mxu0 0.0
      %855 = vmatpush1.msra.mxu0 %v311
      %856 = vmatprep.subr.mxu0 0.0
      %857 = vmatpush1.msra.mxu0 %v312
      %858 = vmatprep.subr.mxu0 0.0
      %859 = vmatpush1.msra.mxu0 %v313
      %860 = vmatprep.subr.mxu0 0.0
      %861 = vmatpush1.msra.mxu0 %v314
      %862 = vmatprep.subr.mxu0 0.0
      %863 = vmatpush1.msra.mxu0 0.0
      %864 = vmatprep.subr.mxu0 0.0
      %865 = vmatpush1.msra.mxu0 0.0
      %866 = vmatprep.subr.mxu0 0.0
      %867 = vmatpush1.msra.mxu0 0.0
      %868 = vmatprep.subr.mxu0 0.0
      %869 = vmatpush1.msra.mxu0 0.0
      %870 = vmatprep.subr.mxu0 0.0
      %871 = vmatpush1.msra.mxu0 0.0
      %872 = vmatprep.subr.mxu0 0.0
      %873 = vmatpush1.msra.mxu0 0.0
      %874 = vmatprep.subr.mxu0 0.0
      %875 = vmatpush1.msra.mxu0 0.0
      %876 = vmatprep.subr.mxu0 0.0
      %877 = vmatpush1.msra.mxu0 0.0
      %878 = vmatprep.subr.mxu0 0.0
      %879 = vmatpush1.msra.mxu0 0.0
      %880 = vmatprep.subr.mxu0 0.0
      %881 = vmatpush1.msra.mxu0 0.0
      %882 = vmatprep.subr.mxu0 0.0
      %883 = vmatpush1.msra.mxu0 0.0
      %884 = vmatprep.subr.mxu0 0.0
      %885 = vmatpush1.msra.mxu0 0.0
      %886 = vmatprep.subr.mxu0 0.0
      %887 = vmatpush1.msra.mxu0 0.0
      %888 = vmatprep.subr.mxu0 0.0
      %889 = vmatpush1.msra.mxu0 0.0
      %890 = vmatprep.subr.mxu0 0.0
      %891 = vmatpush1.msra.mxu0 0.0
      %892 = vmatprep.subr.mxu0 0.0
      %893 = vmatpush1.msra.mxu0 0.0
      %894 = vmatprep.subr.mxu0 0.0
      %895 = vmatpush1.msra.mxu0 0.0
      %896 = vmatprep.subr.mxu0 0.0
      %897 = vmatpush1.msra.mxu0 0.0
      %898 = vmatprep.subr.mxu0 0.0
      %899 = vmatpush1.msra.mxu0 0.0
      %900 = vmatprep.subr.mxu0 0.0
      %901 = vmatpush1.msra.mxu0 0.0
      %902 = vmatprep.subr.mxu0 0.0
      %903 = vmatpush1.msra.mxu0 0.0
      %904 = vmatprep.subr.mxu0 0.0
      %905 = vmatpush1.msra.mxu0 0.0
      %906 = vmatprep.subr.mxu0 0.0
      %907 = vmatpush1.msra.mxu0 0.0
      %908 = vmatprep.subr.mxu0 0.0
      %909 = vmatpush1.msra.mxu0 0.0
      %910 = vmatprep.subr.mxu0 0.0
      %911 = vmatpush1.msra.mxu0 0.0
      %912 = vmatprep.subr.mxu0 0.0
      %913 = vmatpush1.msra.mxu0 0.0
      %914 = vmatprep.subr.mxu0 0.0
      %915 = vmatpush1.msra.mxu0 0.0
      %916 = vmatprep.subr.mxu0 0.0
      %917 = vmatpush1.msra.mxu0 0.0
      %918 = vmatprep.mubr.f32.mxu0 0.0
      %919 = vmatmul.mubr.f32.gmra.mrb[0].mxu0 %v852
      %v920 = vpop.f32.mrb[0].mxu0
      %v921 = vadd.f32 0.0, %v920
      %v922 = vpop.f32.mrb[0].mxu0
      %923 = vdwg.mxu0
      %v924 = vadd.f32 %v851, %v921
      %v925 = vxor.u32 %v924, 2147483648
      %v926 = vmul.f32 %v925, 1.442695
      %v927 = vpow.pop %v926
      %v928 = vadd.f32 %v927, 1.0
      %v929 = vrcp.pop %v928
      %v930 = vmul.f32 1.0, %v929
      %v931 = vtanh.pop %v924
      %v932 = vmul.f32 %v930, %v732
      %934 = vrot.lane.b32.xlu0 %v931, 64
      %v935 = vpop.permute.xlu0 %934
      %v937 = vmul.f32 %v930, %v935
      %939 = vrot.lane.b32.xlu0 %v937, 32
      %v940 = vpop.permute.xlu0 %939
      %v942 = vadd.f32 %v932, %v940
      %v943 = vtanh.pop %v942
      %945 = vrot.lane.b32.xlu0 %v943, 64
      %v946 = vpop.permute.xlu0 %945
      %v948 = vmul.f32 %v930, %v946
      %950 = vrot.lane.b32.xlu0 %v849, 32
      %v951 = vpop.permute.xlu0 %950
      %s953 = scalar_lea.vmem %s287, 4
      %954 = vst.msk [vmem:[%s953] sm:$0x3] %vm533, %v951
      %956 = vrot.lane.b32.xlu0 %v948, 32
      %v957 = vpop.permute.xlu0 %956
      %s959 = scalar_lea.vmem %s294, 2
      %960 = vst.msk [vmem:[%s959] sm:$0x3] %vm533, %v957
      %s961 = scalar_lea.vmem %s273, 6
      %v962 = vld [vmem:[%s961] sm:$0x3]
      %v963 = vsel %vm322, %v951, 0
      %965 = vmatprep.subr.mxu0 0.0
      %966 = vmatpush1.msra.mxu0 %v306
      %967 = vmatprep.subr.mxu0 0.0
      %968 = vmatpush1.msra.mxu0 %v307
      %969 = vmatprep.subr.mxu0 0.0
      %970 = vmatpush1.msra.mxu0 %v308
      %971 = vmatprep.subr.mxu0 0.0
      %972 = vmatpush1.msra.mxu0 %v309
      %973 = vmatprep.subr.mxu0 0.0
      %974 = vmatpush1.msra.mxu0 0.0
      %975 = vmatprep.subr.mxu0 0.0
      %976 = vmatpush1.msra.mxu0 0.0
      %977 = vmatprep.subr.mxu0 0.0
      %978 = vmatpush1.msra.mxu0 0.0
      %979 = vmatprep.subr.mxu0 0.0
      %980 = vmatpush1.msra.mxu0 0.0
      %981 = vmatprep.subr.mxu0 0.0
      %982 = vmatpush1.msra.mxu0 0.0
      %983 = vmatprep.subr.mxu0 0.0
      %984 = vmatpush1.msra.mxu0 0.0
      %985 = vmatprep.subr.mxu0 0.0
      %986 = vmatpush1.msra.mxu0 0.0
      %987 = vmatprep.subr.mxu0 0.0
      %988 = vmatpush1.msra.mxu0 0.0
      %989 = vmatprep.subr.mxu0 0.0
      %990 = vmatpush1.msra.mxu0 0.0
      %991 = vmatprep.subr.mxu0 0.0
      %992 = vmatpush1.msra.mxu0 0.0
      %993 = vmatprep.subr.mxu0 0.0
      %994 = vmatpush1.msra.mxu0 0.0
      %995 = vmatprep.subr.mxu0 0.0
      %996 = vmatpush1.msra.mxu0 0.0
      %997 = vmatprep.subr.mxu0 0.0
      %998 = vmatpush1.msra.mxu0 0.0
      %999 = vmatprep.subr.mxu0 0.0
      %1000 = vmatpush1.msra.mxu0 0.0
      %1001 = vmatprep.subr.mxu0 0.0
      %1002 = vmatpush1.msra.mxu0 0.0
      %1003 = vmatprep.subr.mxu0 0.0
      %1004 = vmatpush1.msra.mxu0 0.0
      %1005 = vmatprep.subr.mxu0 0.0
      %1006 = vmatpush1.msra.mxu0 0.0
      %1007 = vmatprep.subr.mxu0 0.0
      %1008 = vmatpush1.msra.mxu0 0.0
      %1009 = vmatprep.subr.mxu0 0.0
      %1010 = vmatpush1.msra.mxu0 0.0
      %1011 = vmatprep.subr.mxu0 0.0
      %1012 = vmatpush1.msra.mxu0 0.0
      %1013 = vmatprep.subr.mxu0 0.0
      %1014 = vmatpush1.msra.mxu0 0.0
      %1015 = vmatprep.subr.mxu0 0.0
      %1016 = vmatpush1.msra.mxu0 0.0
      %1017 = vmatprep.subr.mxu0 0.0
      %1018 = vmatpush1.msra.mxu0 0.0
      %1019 = vmatprep.subr.mxu0 0.0
      %1020 = vmatpush1.msra.mxu0 0.0
      %1021 = vmatprep.subr.mxu0 0.0
      %1022 = vmatpush1.msra.mxu0 0.0
      %1023 = vmatprep.subr.mxu0 0.0
      %1024 = vmatpush1.msra.mxu0 0.0
      %1025 = vmatprep.subr.mxu0 0.0
      %1026 = vmatpush1.msra.mxu0 0.0
      %1027 = vmatprep.subr.mxu0 0.0
      %1028 = vmatpush1.msra.mxu0 0.0
      %1029 = vmatprep.mubr.f32.mxu0 0.0
      %1030 = vmatmul.mubr.f32.gmra.mrb[0].mxu0 %v963
      %v1031 = vpop.f32.mrb[0].mxu0
      %v1032 = vadd.f32 0.0, %v1031
      %v1033 = vpop.f32.mrb[0].mxu0
      %1034 = vdwg.mxu0
      %v1035 = vadd.f32 %v962, %v1032
      %v1036 = vxor.u32 %v1035, 2147483648
      %v1037 = vmul.f32 %v1036, 1.442695
      %v1038 = vpow.pop %v1037
      %v1039 = vadd.f32 %v1038, 1.0
      %v1040 = vrcp.pop %v1039
      %v1041 = vmul.f32 1.0, %v1040
      %v1042 = vtanh.pop %v1035
      %v1043 = vmul.f32 %v1041, %v843
      %1045 = vrot.lane.b32.xlu0 %v1042, 64
      %v1046 = vpop.permute.xlu0 %1045
      %v1048 = vmul.f32 %v1041, %v1046
      %1050 = vrot.lane.b32.xlu0 %v1048, 32
      %v1051 = vpop.permute.xlu0 %1050
      %v1053 = vadd.f32 %v1043, %v1051
      %v1054 = vtanh.pop %v1053
      %1056 = vrot.lane.b32.xlu0 %v1054, 64
      %v1057 = vpop.permute.xlu0 %1056
      %v1059 = vmul.f32 %v1041, %v1057
      %v1060 = vld [vmem:[%s280] sm:$0x3]
      %v1061 = vsel %vm322, %v957, 0
      %1063 = vmatprep.subr.mxu0 0.0
      %1064 = vmatpush1.msra.mxu0 %v311
      %1065 = vmatprep.subr.mxu0 0.0
      %1066 = vmatpush1.msra.mxu0 %v312
      %1067 = vmatprep.subr.mxu0 0.0
      %1068 = vmatpush1.msra.mxu0 %v313
      %1069 = vmatprep.subr.mxu0 0.0
      %1070 = vmatpush1.msra.mxu0 %v314
      %1071 = vmatprep.subr.mxu0 0.0
      %1072 = vmatpush1.msra.mxu0 0.0
      %1073 = vmatprep.subr.mxu0 0.0
      %1074 = vmatpush1.msra.mxu0 0.0
      %1075 = vmatprep.subr.mxu0 0.0
      %1076 = vmatpush1.msra.mxu0 0.0
      %1077 = vmatprep.subr.mxu0 0.0
      %1078 = vmatpush1.msra.mxu0 0.0
      %1079 = vmatprep.subr.mxu0 0.0
      %1080 = vmatpush1.msra.mxu0 0.0
      %1081 = vmatprep.subr.mxu0 0.0
      %1082 = vmatpush1.msra.mxu0 0.0
      %1083 = vmatprep.subr.mxu0 0.0
      %1084 = vmatpush1.msra.mxu0 0.0
      %1085 = vmatprep.subr.mxu0 0.0
      %1086 = vmatpush1.msra.mxu0 0.0
      %1087 = vmatprep.subr.mxu0 0.0
      %1088 = vmatpush1.msra.mxu0 0.0
      %1089 = vmatprep.subr.mxu0 0.0
      %1090 = vmatpush1.msra.mxu0 0.0
      %1091 = vmatprep.subr.mxu0 0.0
      %1092 = vmatpush1.msra.mxu0 0.0
      %1093 = vmatprep.subr.mxu0 0.0
      %1094 = vmatpush1.msra.mxu0 0.0
      %1095 = vmatprep.subr.mxu0 0.0
      %1096 = vmatpush1.msra.mxu0 0.0
      %1097 = vmatprep.subr.mxu0 0.0
      %1098 = vmatpush1.msra.mxu0 0.0
      %1099 = vmatprep.subr.mxu0 0.0
      %1100 = vmatpush1.msra.mxu0 0.0
      %1101 = vmatprep.subr.mxu0 0.0
      %1102 = vmatpush1.msra.mxu0 0.0
      %1103 = vmatprep.subr.mxu0 0.0
      %1104 = vmatpush1.msra.mxu0 0.0
      %1105 = vmatprep.subr.mxu0 0.0
      %1106 = vmatpush1.msra.mxu0 0.0
      %1107 = vmatprep.subr.mxu0 0.0
      %1108 = vmatpush1.msra.mxu0 0.0
      %1109 = vmatprep.subr.mxu0 0.0
      %1110 = vmatpush1.msra.mxu0 0.0
      %1111 = vmatprep.subr.mxu0 0.0
      %1112 = vmatpush1.msra.mxu0 0.0
      %1113 = vmatprep.subr.mxu0 0.0
      %1114 = vmatpush1.msra.mxu0 0.0
      %1115 = vmatprep.subr.mxu0 0.0
      %1116 = vmatpush1.msra.mxu0 0.0
      %1117 = vmatprep.subr.mxu0 0.0
      %1118 = vmatpush1.msra.mxu0 0.0
      %1119 = vmatprep.subr.mxu0 0.0
      %1120 = vmatpush1.msra.mxu0 0.0
      %1121 = vmatprep.subr.mxu0 0.0
      %1122 = vmatpush1.msra.mxu0 0.0
      %1123 = vmatprep.subr.mxu0 0.0
      %1124 = vmatpush1.msra.mxu0 0.0
      %1125 = vmatprep.subr.mxu0 0.0
      %1126 = vmatpush1.msra.mxu0 0.0
      %1127 = vmatprep.mubr.f32.mxu0 0.0
      %1128 = vmatmul.mubr.f32.gmra.mrb[0].mxu0 %v1061
      %v1129 = vpop.f32.mrb[0].mxu0
      %v1130 = vadd.f32 0.0, %v1129
      %v1131 = vpop.f32.mrb[0].mxu0
      %1132 = vdwg.mxu0
      %v1133 = vadd.f32 %v1060, %v1130
      %v1134 = vxor.u32 %v1133, 2147483648
      %v1135 = vmul.f32 %v1134, 1.442695
      %v1136 = vpow.pop %v1135
      %v1137 = vadd.f32 %v1136, 1.0
      %v1138 = vrcp.pop %v1137
      %v1139 = vmul.f32 1.0, %v1138
      %v1140 = vtanh.pop %v1133
      %v1141 = vmul.f32 %v1139, %v942
      %1143 = vrot.lane.b32.xlu0 %v1140, 64
      %v1144 = vpop.permute.xlu0 %1143
      %v1146 = vmul.f32 %v1139, %v1144
      %1148 = vrot.lane.b32.xlu0 %v1146, 32
      %v1149 = vpop.permute.xlu0 %1148
      %v1151 = vadd.f32 %v1141, %v1149
      %v1152 = vtanh.pop %v1151
      %1154 = vrot.lane.b32.xlu0 %v1152, 64
      %v1155 = vpop.permute.xlu0 %1154
      %v1157 = vmul.f32 %v1139, %v1155
      %1159 = vrot.lane.b32.xlu0 %v1059, 32
      %v1160 = vpop.permute.xlu0 %1159
      %s1162 = scalar_lea.vmem %s287, 6
      %1163 = vst.msk [vmem:[%s1162] sm:$0x3] %vm533, %v1160
      %1165 = vrot.lane.b32.xlu0 %v1157, 32
      %v1166 = vpop.permute.xlu0 %1165
      %1168 = vst.msk [vmem:[%s294] sm:$0x3] %vm533, %v1166
      %1169 = vst.msk [vmem:[#allocation2] sm:$0x3] %vm533, %v1160
      %1171 = vrot.lane.b32.xlu0 %v1053, 96
      %v1172 = vpop.permute.xlu0 %1171
      %1174 = vst.msk [vmem:[#allocation3] sm:$0x3] %vm533, %v1172
      %1175 = vst.msk [vmem:[%s317] sm:$0x3] %vm533, %v1166
      %1177 = vrot.lane.b32.xlu0 %v1151, 96
      %v1178 = vpop.permute.xlu0 %1177
      %1180 = vst.msk [vmem:[%s319] sm:$0x3] %vm533, %v1178
      %p1181 = scmp.eq.s32.totalorder %s18, 1
      // Predicated region
      $region37: #{run.2} parent=31 // pred_check
        %p1182 = pneg %p1181
      $region38: #{run.2} parent=31 // pred_check_branch
        %1184 = sbr.rel (%p1182) target = $region40
      $region39: #{run.2} parent=31 // pred_region
        %1185 = vst.msk [vmem:[%s5] sm:$0x3] %vm533, %v1160
        %s1186 = scalar_lea.vmem %s5, 2
        %1187 = vst.msk [vmem:[%s1186] sm:$0x3] %vm533, %v1166
        %1188 = vst.msk [vmem:[%s6] sm:$0x3] %vm533, %v1172
        %s1189 = scalar_lea.vmem %s6, 2
        %1190 = vst.msk [vmem:[%s1189] sm:$0x3] %vm533, %v1178
      $region40: #{run.2} parent=31 // pred_fallthru
        _
      %s1191 = smul.u32 4, %s18
      %p1192 = scmp.lt.s32.totalorder %s1191, 7
      %s1193 = scalar_select %p1192, %s1191, 7
      %s1194 = smul.addr %s1193, 2
      %s1195 = scalar_lea.vmem %s3, %s1194
      %s1196 = ssub.s32 1, %s18
      %s1197 = smul.u32 4, %s1196
      %p1198 = scmp.lt.s32.totalorder %s1197, 7
      %s1199 = scalar_select %p1198, %s1197, 7
      %s1200 = smul.addr %s1199, 2
      %s1201 = scalar_lea.vmem %s4, %s1200
      // Predicated region
      $region41: #{run.2} parent=31 // pred_check
        %p1202 = pneg %p111
      $region42: #{run.2} parent=31 // pred_check_branch
        %1204 = sbr.rel (%p1202) target = $region44
      $region43: #{run.2} parent=31 // pred_region
        %s1205 = smul.u32 4, %s18
      $region44: #{run.2} parent=31 // pred_fallthru
        _
      // Predicated region
      $region45: #{run.2} parent=31 // pred_check
        %p1206 = pneg %p139
      $region46: #{run.2} parent=31 // pred_check_branch
        %1208 = sbr.rel (%p1206) target = $region48
      $region47: #{run.2} parent=31 // pred_region
        %s1209 = ssub.s32 1, %s18
        %s1210 = smul.u32 4, %s1209
      $region48: #{run.2} parent=31 // pred_fallthru
        _
      // Predicated region
      $region49: #{run.2} parent=31 // pred_check
        %p1211 = pneg %p160
      $region50: #{run.2} parent=31 // pred_check_branch
        %1213 = sbr.rel (%p1211) target = $region52
      $region51: #{run.2} parent=31 // pred_region
        _
      $region52: #{run.2} parent=31 // pred_fallthru
        _
      // Predicated region
      $region53: #{run.2} parent=31 // pred_check
        %p1214 = pneg %p181
      $region54: #{run.2} parent=31 // pred_check_branch
        %1216 = sbr.rel (%p1214) target = $region56
      $region55: #{run.2} parent=31 // pred_region
        _
      $region56: #{run.2} parent=31 // pred_fallthru
        _
      // Predicated region
      $region57: #{run.2} parent=31 // pred_check
        %p1217 = pneg %p160
      $region58: #{run.2} parent=31 // pred_check_branch
        %1219 = sbr.rel (%p1217) target = $region60
      $region59: #{run.2} parent=31 // pred_region
        _
      $region60: #{run.2} parent=31 // pred_fallthru
        _
      // Predicated region
      $region61: #{run.2} parent=31 // pred_check
        %p1220 = pneg %p181
      $region62: #{run.2} parent=31 // pred_check_branch
        %1222 = sbr.rel (%p1220) target = $region64
      $region63: #{run.2} parent=31 // pred_region
        _
      $region64: #{run.2} parent=31 // pred_fallthru
        _
    $region32: #{run.2} parent=5 // pred_fallthru
      _
    %p1223 = scmp.le.s32.totalorder 2, %s13
    // Predicated region
    $region65: #{run.2} parent=5 // pred_check
      %p1224 = pneg %p1223
    $region66: #{run.2} parent=5 // pred_check_branch
      %1226 = sbr.rel (%p1224) target = $region68
    $region67: #{run.2} parent=5 // pred_region
      %s1227 = ssub.s32 %s13, 2
      // Predicated region
      $region69: #{run.2} parent=67 // pred_check
        %p1228 = pneg %p117
      $region70: #{run.2} parent=67 // pred_check_branch
        %1230 = sbr.rel (%p1228) target = $region72
      $region71: #{run.2} parent=67 // pred_region
        %s1231 = smul.u32 4, %s19
        %p1232 = scmp.lt.s32.totalorder %s1231, 7
        %s1233 = scalar_select %p1232, %s1231, 7
        %s1234 = smul.addr %s1233, 2
        %s1235 = scalar_lea.vmem %s3, %s1234
      $region72: #{run.2} parent=67 // pred_fallthru
        _
      // Predicated region
      $region73: #{run.2} parent=67 // pred_check
        %p1236 = pneg %p145
      $region74: #{run.2} parent=67 // pred_check_branch
        %1238 = sbr.rel (%p1236) target = $region76
      $region75: #{run.2} parent=67 // pred_region
        %s1239 = ssub.s32 1, %s19
        %s1240 = smul.u32 4, %s1239
        %p1241 = scmp.lt.s32.totalorder %s1240, 7
        %s1242 = scalar_select %p1241, %s1240, 7
        %s1243 = smul.addr %s1242, 2
        %s1244 = scalar_lea.vmem %s4, %s1243
      $region76: #{run.2} parent=67 // pred_fallthru
        _
    $region68: #{run.2} parent=5 // pred_fallthru
      _
  $region6: #{run.2} parent=0 // loop_footer
    %s17 = sadd.s32 1, %s13
  $region7: #{run.2} parent=0 // loop_footer_branch
    %12 = sbr.rel target = $region3
  $region8: #{run.2} parent=0 // loop_exit
    _

</llo_original>
